<compile_context>
chip_gen: v7x
topology: tpu7x:2x2x1
jax: 0.10.0
libtpu: 0.0.40
codegen_flags: <defaults>
</compile_context>

<pallas_src>
import math
import jax
import jax.numpy as jnp
from jax.experimental import pallas as pl
from jax.experimental.pallas import tpu as pltpu

# ----------------------------- config (long_term_forecast) -------------------
TASK      = "long_term_forecast"
SEQ_LEN   = 32
PRED_LEN  = 8
ENC_IN    = 4                      # n_vars
D_MODEL   = 32
D_STATE   = 8                      # configs.d_ff -> Mamba d_state
D_CONV    = 4
EXPAND    = 2
E_LAYERS  = 2
PATCH_LEN = 16
STRIDE    = 8
PADDING   = STRIDE
D_INNER   = EXPAND * D_MODEL                            # 64
DT_RANK   = math.ceil(D_MODEL / 16)                     # 2
PATCH_NUM = int((SEQ_LEN - PATCH_LEN) / STRIDE + 2)     # 4
HEAD_NF   = D_MODEL * PATCH_NUM                         # 128
BATCH     = 2
SE        = D_STATE * D_INNER                           # 512 (lane-dense state width)

# ----------------------------- helpers --------------------------------------
def _silu(x):
    # sigmoid via EUP approximate reciprocal (its own VLIW slot, overlaps VPU work)
    return x * pl.reciprocal(1.0 + jnp.exp(-x), approx=True)

def _softplus(x):
    return jnp.where(x > 20.0, x, jnp.log1p(jnp.exp(jnp.minimum(x, 20.0))))

# ----------------------------- fused Pallas kernel ---------------------------
def fused_forward_kernel(*refs):
    n_layer_refs = 7 * E_LAYERS
    patches_ref, pos_ref = refs[0], refs[1]
    layer_refs = refs[2:2 + n_layer_refs]
    wh_ref = refs[2 + n_layer_refs]
    bh_ref = refs[3 + n_layer_refs]
    o_ref  = refs[4 + n_layer_refs]

    R  = patches_ref.shape[0]                 # = PATCH_NUM * bn (static)
    bn = R // PATCH_NUM

    # positional embedding folded through layer-0 in_proj -> per-patch bias on xz;
    # rows are ordered t*bn + series so the broadcast is per sublane-aligned block.
    pos_xz = pos_ref[...]                                                     # (N, 2E)
    pos_b = jnp.concatenate(
        [jnp.broadcast_to(pos_xz[t:t + 1, :], (bn, 2 * D_INNER))
         for t in range(PATCH_NUM)], axis=0)                                  # (R, 2E)

    x_in = patches_ref[...]                                                   # (R, 16) f32

    for l in range(E_LAYERS):
        (w_in_ref, convw_ref, convb_ref, wxdt_ref,
         bdt_ref, aflat_ref, dpar_ref) = layer_refs[7 * l:7 * (l + 1)]

        # ---- in_proj (value_embedding / previous out_proj folded in) ----
        xz = jnp.dot(x_in.astype(jnp.bfloat16), w_in_ref[...],
                     preferred_element_type=jnp.float32)                      # (R, 2E)
        if l == 0:
            xz = xz + pos_b
        xpart = xz[:, :D_INNER]
        z     = xz[:, D_INNER:]

        # ---- causal depthwise conv1d + SiLU (one zero-pad, sublane-aligned slices) ----
        conv_w = convw_ref[...]                                               # (D_CONV, E)
        xp = jnp.concatenate(
            [jnp.zeros(((D_CONV - 1) * bn, D_INNER), jnp.float32), xpart], axis=0)
        acc = convb_ref[...] + conv_w[D_CONV - 1:D_CONV, :] * xpart           # s = 0 term
        for s in range(1, D_CONV):
            off = (D_CONV - 1 - s) * bn
            acc = acc + conv_w[D_CONV - 1 - s:D_CONV - s, :] * xp[off:off + R, :]
        u = _silu(acc)                                                        # (R, E)

        # ---- fused x_proj + dt_proj; B/C arrive already broadcast across E ----
        # weight columns are [B_wide (S*E), C_wide (S*E), delta (E)] (all 128-aligned)
        x_dbl = jnp.dot(u.astype(jnp.bfloat16), wxdt_ref[...],
                        preferred_element_type=jnp.float32)                   # (R, 2*SE+E)
        B_w   = x_dbl[:, :SE]                                                 # (R, SE)
        C_w   = x_dbl[:, SE:2 * SE]                                           # (R, SE)
        delta = _softplus(x_dbl[:, 2 * SE:] + bdt_ref[...])                   # (R, E)

        # lane-dense precompute (off the serial chain)
        delta_w = jnp.concatenate([delta] * D_STATE, axis=1)                  # (R, SE)
        du_w    = jnp.concatenate([delta * u] * D_STATE, axis=1)              # (R, SE)
        dA  = jnp.exp(delta_w * aflat_ref[...])                               # (R, SE)
        dBu = du_w * B_w                                                      # (R, SE)

        # ---- selective scan: only the h-recurrence is serial (4 steps, 4 vregs) ----
        h = jnp.zeros((bn, SE), jnp.float32)
        hs = []
        for t in range(PATCH_NUM):
            lo = t * bn
            h = dA[lo:lo + bn, :] * h + dBu[lo:lo + bn, :]
            hs.append(h)
        hC = jnp.concatenate(hs, axis=0) * C_w                                # (R, SE)

        # sum over states (full-R, off the serial chain)
        y = hC[:, :D_INNER]
        for s in range(1, D_STATE):
            y = y + hC[:, s * D_INNER:(s + 1) * D_INNER]                      # (R, E)

        # hoisted skip term + gate; out_proj is folded into the next layer / the head
        y = (y + dpar_ref[...] * u) * _silu(z)                                # (R, E)
        x_in = y

    # ---- FlattenHead: one (bn, N*E) @ (N*E, PRED_LEN) matmul (last out_proj folded) ----
    y_cat = jnp.concatenate([x_in[t * bn:(t + 1) * bn, :] for t in range(PATCH_NUM)],
                            axis=1)                                           # (bn, N*E)
    o_ref[...] = jnp.dot(y_cat.astype(jnp.bfloat16), wh_ref[...],
                         preferred_element_type=jnp.float32) + bh_ref[...]

# ----------------------------- Pallas wrapper --------------------------------
def fused_forward(patches2d, params):
    bn = patches2d.shape[0] // PATCH_NUM
    args = [patches2d, params['pos_xz']]
    for lp in params['layers']:
        args += [lp['w_in'], lp['conv_w'], lp['conv_b'], lp['w_xdt'],
                 lp['b_dt'], lp['a_flat'], lp['d_par']]
    args += [params['w_head'], params['b_head']]
    return pl.pallas_call(
        fused_forward_kernel,
        out_shape=jax.ShapeDtypeStruct((bn, PRED_LEN), jnp.float32),
        in_specs=[pl.BlockSpec(memory_space=pltpu.MemorySpace.VMEM) for _ in args],
        out_specs=pl.BlockSpec(memory_space=pltpu.MemorySpace.VMEM),
    )(*args)
    # TODO(synk): for large batch*n_vars on v7x, add a 'parallel' grid axis over bn to
    # use both TensorCores; at bn=8 a single program is cheaper.

# ----------------------------- glue (JAX) ------------------------------------
def positional_embedding(n, d):
    pos = jnp.arange(n, dtype=jnp.float32)[:, None]
    div = jnp.exp(jnp.arange(0, d, 2, dtype=jnp.float32) * (-(math.log(10000.0) / d)))
    pe = jnp.zeros((n, d), jnp.float32)
    pe = pe.at[:, 0::2].set(jnp.sin(pos * div))
    pe = pe.at[:, 1::2].set(jnp.cos(pos * div))
    return pe


def patchify(x):
    # x: (B, nvars, seq_len) -> (PATCH_NUM * B*nvars, PATCH_LEN), rows ordered t*BN + bn.
    # ReplicationPad1d((0, PADDING)) + unfold(size=PATCH_LEN, step=STRIDE)
    x_pad = jnp.concatenate([x, jnp.repeat(x[..., -1:], PADDING, axis=-1)], axis=-1)
    patches = jnp.stack(
        [x_pad[..., i * STRIDE:i * STRIDE + PATCH_LEN] for i in range(PATCH_NUM)], axis=2)
    patches = patches.reshape(-1, PATCH_NUM, PATCH_LEN)        # (BN, N, P), bn = b*nvars+v
    return jnp.transpose(patches, (1, 0, 2)).reshape(-1, PATCH_LEN)


def init_params(key):
    keys = jax.random.split(key, E_LAYERS + 3)
    w_emb = 0.02 * jax.random.normal(keys[0], (PATCH_LEN, D_MODEL), jnp.float32)
    pos = positional_embedding(PATCH_NUM, D_MODEL)
    w_head = 0.05 * jax.random.normal(keys[1], (HEAD_NF, PRED_LEN), jnp.float32)
    # rows t*D_MODEL + d  <-  flat index d*PATCH_NUM + t (Flatten over (D, N) in the ref)
    w_head_r = jnp.transpose(w_head.reshape(D_MODEL, PATCH_NUM, PRED_LEN),
                             (1, 0, 2)).reshape(HEAD_NF, PRED_LEN)

    raw = []
    for l in range(E_LAYERS):
        lk = jax.random.split(keys[2 + l], 6)
        raw.append(dict(
            w_in   = 0.05 * jax.random.normal(lk[0], (D_MODEL, 2 * D_INNER), jnp.float32),
            conv_w = 0.20 * jax.random.normal(lk[1], (D_CONV, D_INNER), jnp.float32),
            conv_b = jnp.zeros((1, D_INNER), jnp.float32),
            w_x    = 0.05 * jax.random.normal(lk[2], (D_INNER, DT_RANK + 2 * D_STATE), jnp.float32),
            w_dt   = 0.10 * jax.random.normal(lk[3], (DT_RANK, D_INNER), jnp.float32),
            b_dt   = 0.10 * jax.random.normal(lk[4], (1, D_INNER), jnp.float32),
            # A = -exp(A_log), A_log[s, e] = log(s+1)  ->  a_neg[s, e] = -(s+1)
            a_neg  = -jnp.broadcast_to(jnp.arange(1, D_STATE + 1, dtype=jnp.float32)[:, None],
                                       (D_STATE, D_INNER)),
            d_par  = jnp.ones((1, D_INNER), jnp.float32),
            w_out  = 0.05 * jax.random.normal(lk[5], (D_INNER, D_MODEL), jnp.float32),
        ))

    layers = []
    for l, rl in enumerate(raw):
        # fold the preceding bias-free linear map into this layer's in_proj (exact)
        pre = w_emb if l == 0 else raw[l - 1]['w_out']
        w_in_f = (pre @ rl['w_in']).astype(jnp.bfloat16)                     # (16|64, 2E)
        # fused x_proj/dt_proj with B/C pre-broadcast across E (lane-dense layout):
        # columns = [B_wide (S*E), C_wide (S*E), delta (E)]  (all 128-lane aligned)
        w_B = jnp.repeat(rl['w_x'][:, DT_RANK:DT_RANK + D_STATE], D_INNER, axis=1)   # (E, SE)
        w_C = jnp.repeat(rl['w_x'][:, DT_RANK + D_STATE:], D_INNER, axis=1)          # (E, SE)
        w_delta = rl['w_x'][:, :DT_RANK] @ rl['w_dt']                                # (E, E)
        w_xdt = jnp.concatenate([w_B, w_C, w_delta], axis=1).astype(jnp.bfloat16)    # (E, 2SE+E)
        layers.append(dict(
            w_in=w_in_f, conv_w=rl['conv_w'], conv_b=rl['conv_b'], w_xdt=w_xdt,
            b_dt=rl['b_dt'], a_flat=rl['a_neg'].reshape(1, SE), d_par=rl['d_par']))

    # positional embedding folded through layer-0 in_proj -> (N, 2E) per-patch bias
    pos_xz = pos @ raw[0]['w_in']
    # last out_proj folded into the head; per-t blocks stacked for a single matmul
    wh = jnp.concatenate(
        [raw[-1]['w_out'] @ w_head_r[t * D_MODEL:(t + 1) * D_MODEL, :]
         for t in range(PATCH_NUM)], axis=0).astype(jnp.bfloat16)             # (N*E, PRED_LEN)

    return dict(pos_xz=pos_xz, layers=layers, w_head=wh,
                b_head=jnp.zeros((1, PRED_LEN), jnp.float32))


def forward(params, x_enc):
    # x_enc: (B, SEQ_LEN, ENC_IN); x_mark_enc / x_dec / x_mark_dec unused by forecast path
    b = x_enc.shape[0]
    means = jnp.mean(x_enc, axis=1, keepdims=True)
    xc = x_enc - means
    stdev = jnp.sqrt(jnp.var(xc, axis=1, keepdims=True) + 1e-5)   # unbiased=False
    xn = jnp.transpose(xc / stdev, (0, 2, 1))                     # (B, nvars, seq_len)

    patches2d = patchify(xn)                                      # (N*BN, P), rows t*BN+bn
    dec = fused_forward(patches2d, params)                        # (BN, pred_len), bn=b*nv+v
    dec = jnp.transpose(dec.reshape(b, ENC_IN, PRED_LEN), (0, 2, 1))  # (B, pred_len, nvars)

    dec = dec * stdev[:, 0, :][:, None, :] + means[:, 0, :][:, None, :]
    return dec[:, -PRED_LEN:, :]

# ----------------------------- main ------------------------------------------
if __name__ == "__main__":
    key = jax.random.PRNGKey(0)
    pkey, xkey = jax.random.split(key)
    params = init_params(pkey)
    x_enc = jax.random.normal(xkey, (BATCH, SEQ_LEN, ENC_IN), jnp.float32)

    out = jax.jit(forward)(params, x_enc)
    out = jax.block_until_ready(out)
    assert out.shape == (BATCH, PRED_LEN, ENC_IN), out.shape
    assert bool(jnp.all(jnp.isfinite(out)))
    print("KERNEL_OK")
</pallas_src>

<mosaic_0001>
module attributes {stable_mosaic.version = 11 : i64} {
  func.func @fused_forward_kernel(%arg0: memref<32x16xf32, #tpu.memory_space<vmem>>, %arg1: memref<4x128xf32, #tpu.memory_space<vmem>>, %arg2: memref<16x128xbf16, #tpu.memory_space<vmem>>, %arg3: memref<4x64xf32, #tpu.memory_space<vmem>>, %arg4: memref<1x64xf32, #tpu.memory_space<vmem>>, %arg5: memref<64x1088xbf16, #tpu.memory_space<vmem>>, %arg6: memref<1x64xf32, #tpu.memory_space<vmem>>, %arg7: memref<1x512xf32, #tpu.memory_space<vmem>>, %arg8: memref<1x64xf32, #tpu.memory_space<vmem>>, %arg9: memref<64x128xbf16, #tpu.memory_space<vmem>>, %arg10: memref<4x64xf32, #tpu.memory_space<vmem>>, %arg11: memref<1x64xf32, #tpu.memory_space<vmem>>, %arg12: memref<64x1088xbf16, #tpu.memory_space<vmem>>, %arg13: memref<1x64xf32, #tpu.memory_space<vmem>>, %arg14: memref<1x512xf32, #tpu.memory_space<vmem>>, %arg15: memref<1x64xf32, #tpu.memory_space<vmem>>, %arg16: memref<256x8xbf16, #tpu.memory_space<vmem>>, %arg17: memref<1x8xf32, #tpu.memory_space<vmem>>, %arg18: memref<8x8xf32, #tpu.memory_space<vmem>>) attributes {dimension_semantics = [], scalar_prefetch = 0 : i64, scratch_operands = 0 : i64, tpu.core_type = #tpu.core_type<tc>} {
    %c0 = arith.constant 0 : index
    %c0_0 = arith.constant 0 : index
    %0 = vector.load %arg1[%c0, %c0_0] : memref<4x128xf32, #tpu.memory_space<vmem>>, vector<4x128xf32>
    %1 = vector.extract_strided_slice %0 {offsets = [0, 0], sizes = [1, 128], strides = [1, 1]} : vector<4x128xf32> to vector<1x128xf32>
    %2 = vector.shape_cast %1 : vector<1x128xf32> to vector<1x128xf32>
    %3 = vector.broadcast %2 : vector<1x128xf32> to vector<8x128xf32>
    %4 = vector.extract_strided_slice %0 {offsets = [1, 0], sizes = [1, 128], strides = [1, 1]} : vector<4x128xf32> to vector<1x128xf32>
    %5 = vector.shape_cast %4 : vector<1x128xf32> to vector<1x128xf32>
    %6 = vector.broadcast %5 : vector<1x128xf32> to vector<8x128xf32>
    %7 = vector.extract_strided_slice %0 {offsets = [2, 0], sizes = [1, 128], strides = [1, 1]} : vector<4x128xf32> to vector<1x128xf32>
    %8 = vector.shape_cast %7 : vector<1x128xf32> to vector<1x128xf32>
    %9 = vector.broadcast %8 : vector<1x128xf32> to vector<8x128xf32>
    %10 = vector.extract_strided_slice %0 {offsets = [3, 0], sizes = [1, 128], strides = [1, 1]} : vector<4x128xf32> to vector<1x128xf32>
    %11 = vector.shape_cast %10 : vector<1x128xf32> to vector<1x128xf32>
    %12 = vector.broadcast %11 : vector<1x128xf32> to vector<8x128xf32>
    %13 = tpu.concatenate %3, %6, %9, %12 in 0 : vector<8x128xf32>, vector<8x128xf32>, vector<8x128xf32>, vector<8x128xf32> -> vector<32x128xf32>
    %c0_1 = arith.constant 0 : index
    %c0_2 = arith.constant 0 : index
    %14 = vector.load %arg0[%c0_1, %c0_2] : memref<32x16xf32, #tpu.memory_space<vmem>>, vector<32x16xf32>
    %15 = arith.truncf %14 : vector<32x16xf32> to vector<32x16xbf16>
    %c0_3 = arith.constant 0 : index
    %c0_4 = arith.constant 0 : index
    %16 = vector.load %arg2[%c0_3, %c0_4] : memref<16x128xbf16, #tpu.memory_space<vmem>>, vector<16x128xbf16>
    %cst = arith.constant dense<0.000000e+00> : vector<32x128xf32>
    %17 = tpu.matmul %15, %16, %cst {dimension_numbers = #tpu.dot_dimension_numbers<[1], [0], [0], [1], [0, 0, 1, 1], [], []>} : vector<32x16xbf16>, vector<16x128xbf16>, vector<32x128xf32> -> vector<32x128xf32>
    %18 = arith.addf %17, %13 : vector<32x128xf32>
    %19 = vector.extract_strided_slice %18 {offsets = [0, 0], sizes = [32, 64], strides = [1, 1]} : vector<32x128xf32> to vector<32x64xf32>
    %20 = vector.extract_strided_slice %18 {offsets = [0, 64], sizes = [32, 64], strides = [1, 1]} : vector<32x128xf32> to vector<32x64xf32>
    %c0_5 = arith.constant 0 : index
    %c0_6 = arith.constant 0 : index
    %21 = vector.load %arg3[%c0_5, %c0_6] : memref<4x64xf32, #tpu.memory_space<vmem>>, vector<4x64xf32>
    %cst_7 = arith.constant 0.000000e+00 : f32
    %22 = vector.broadcast %cst_7 : f32 to vector<24x64xf32>
    %23 = tpu.concatenate %22, %19 in 0 : vector<24x64xf32>, vector<32x64xf32> -> vector<56x64xf32>
    %c0_8 = arith.constant 0 : index
    %c0_9 = arith.constant 0 : index
    %24 = vector.load %arg4[%c0_8, %c0_9] : memref<1x64xf32, #tpu.memory_space<vmem>>, vector<1x64xf32>
    %25 = vector.extract_strided_slice %21 {offsets = [3, 0], sizes = [1, 64], strides = [1, 1]} : vector<4x64xf32> to vector<1x64xf32>
    %26 = vector.broadcast %25 : vector<1x64xf32> to vector<32x64xf32>
    %27 = arith.mulf %26, %19 : vector<32x64xf32>
    %28 = vector.broadcast %24 : vector<1x64xf32> to vector<32x64xf32>
    %29 = arith.addf %28, %27 : vector<32x64xf32>
    %30 = vector.extract_strided_slice %21 {offsets = [2, 0], sizes = [1, 64], strides = [1, 1]} : vector<4x64xf32> to vector<1x64xf32>
    %31 = vector.extract_strided_slice %23 {offsets = [16, 0], sizes = [32, 64], strides = [1, 1]} : vector<56x64xf32> to vector<32x64xf32>
    %32 = vector.broadcast %30 : vector<1x64xf32> to vector<32x64xf32>
    %33 = arith.mulf %32, %31 : vector<32x64xf32>
    %34 = arith.addf %29, %33 : vector<32x64xf32>
    %35 = vector.extract_strided_slice %21 {offsets = [1, 0], sizes = [1, 64], strides = [1, 1]} : vector<4x64xf32> to vector<1x64xf32>
    %36 = vector.extract_strided_slice %23 {offsets = [8, 0], sizes = [32, 64], strides = [1, 1]} : vector<56x64xf32> to vector<32x64xf32>
    %37 = vector.broadcast %35 : vector<1x64xf32> to vector<32x64xf32>
    %38 = arith.mulf %37, %36 : vector<32x64xf32>
    %39 = arith.addf %34, %38 : vector<32x64xf32>
    %40 = vector.extract_strided_slice %21 {offsets = [0, 0], sizes = [1, 64], strides = [1, 1]} : vector<4x64xf32> to vector<1x64xf32>
    %41 = vector.extract_strided_slice %23 {offsets = [0, 0], sizes = [32, 64], strides = [1, 1]} : vector<56x64xf32> to vector<32x64xf32>
    %42 = vector.broadcast %40 : vector<1x64xf32> to vector<32x64xf32>
    %43 = arith.mulf %42, %41 : vector<32x64xf32>
    %44 = arith.addf %39, %43 : vector<32x64xf32>
    %cst_10 = arith.constant 0.000000e+00 : f32
    %45 = vector.broadcast %cst_10 : f32 to vector<32x64xf32>
    %46 = arith.subf %45, %44 : vector<32x64xf32>
    %47 = math.exp %46 : vector<32x64xf32>
    %cst_11 = arith.constant 1.000000e+00 : f32
    %48 = vector.broadcast %cst_11 : f32 to vector<32x64xf32>
    %49 = arith.addf %48, %47 : vector<32x64xf32>
    %50 = tpu.reciprocal %49 {approx = true} : vector<32x64xf32> -> vector<32x64xf32>
    %51 = arith.mulf %44, %50 : vector<32x64xf32>
    %52 = arith.truncf %51 : vector<32x64xf32> to vector<32x64xbf16>
    %c0_12 = arith.constant 0 : index
    %c0_13 = arith.constant 0 : index
    %53 = vector.load %arg5[%c0_12, %c0_13] : memref<64x1088xbf16, #tpu.memory_space<vmem>>, vector<64x1088xbf16>
    %cst_14 = arith.constant dense<0.000000e+00> : vector<32x1088xf32>
    %54 = tpu.matmul %52, %53, %cst_14 {dimension_numbers = #tpu.dot_dimension_numbers<[1], [0], [0], [1], [0, 0, 1, 1], [], []>} : vector<32x64xbf16>, vector<64x1088xbf16>, vector<32x1088xf32> -> vector<32x1088xf32>
    %55 = vector.extract_strided_slice %54 {offsets = [0, 0], sizes = [32, 512], strides = [1, 1]} : vector<32x1088xf32> to vector<32x512xf32>
    %56 = vector.extract_strided_slice %54 {offsets = [0, 512], sizes = [32, 512], strides = [1, 1]} : vector<32x1088xf32> to vector<32x512xf32>
    %57 = vector.extract_strided_slice %54 {offsets = [0, 1024], sizes = [32, 64], strides = [1, 1]} : vector<32x1088xf32> to vector<32x64xf32>
    %c0_15 = arith.constant 0 : index
    %c0_16 = arith.constant 0 : index
    %58 = vector.load %arg6[%c0_15, %c0_16] : memref<1x64xf32, #tpu.memory_space<vmem>>, vector<1x64xf32>
    %59 = vector.broadcast %58 : vector<1x64xf32> to vector<32x64xf32>
    %60 = arith.addf %57, %59 : vector<32x64xf32>
    %cst_17 = arith.constant 2.000000e+01 : f32
    %61 = vector.broadcast %cst_17 : f32 to vector<32x64xf32>
    %62 = arith.cmpf ogt, %60, %61 : vector<32x64xf32>
    %cst_18 = arith.constant 2.000000e+01 : f32
    %63 = vector.broadcast %cst_18 : f32 to vector<32x64xf32>
    %64 = arith.minimumf %60, %63 : vector<32x64xf32>
    %65 = math.exp %64 : vector<32x64xf32>
    %66 = math.log1p %65 : vector<32x64xf32>
    %67 = arith.select %62, %60, %66 : vector<32x64xi1>, vector<32x64xf32>
    %68 = tpu.concatenate %67, %67, %67, %67, %67, %67, %67, %67 in 1 : vector<32x64xf32>, vector<32x64xf32>, vector<32x64xf32>, vector<32x64xf32>, vector<32x64xf32>, vector<32x64xf32>, vector<32x64xf32>, vector<32x64xf32> -> vector<32x512xf32>
    %69 = arith.mulf %67, %51 : vector<32x64xf32>
    %70 = tpu.concatenate %69, %69, %69, %69, %69, %69, %69, %69 in 1 : vector<32x64xf32>, vector<32x64xf32>, vector<32x64xf32>, vector<32x64xf32>, vector<32x64xf32>, vector<32x64xf32>, vector<32x64xf32>, vector<32x64xf32> -> vector<32x512xf32>
    %c0_19 = arith.constant 0 : index
    %c0_20 = arith.constant 0 : index
    %71 = vector.load %arg7[%c0_19, %c0_20] : memref<1x512xf32, #tpu.memory_space<vmem>>, vector<1x512xf32>
    %72 = vector.broadcast %71 : vector<1x512xf32> to vector<32x512xf32>
    %73 = arith.mulf %68, %72 : vector<32x512xf32>
    %74 = math.exp %73 : vector<32x512xf32>
    %75 = arith.mulf %70, %55 : vector<32x512xf32>
    %cst_21 = arith.constant 0.000000e+00 : f32
    %76 = vector.broadcast %cst_21 : f32 to vector<8x512xf32>
    %77 = vector.extract_strided_slice %74 {offsets = [0, 0], sizes = [8, 512], strides = [1, 1]} : vector<32x512xf32> to vector<8x512xf32>
    %78 = arith.mulf %77, %76 : vector<8x512xf32>
    %79 = vector.extract_strided_slice %75 {offsets = [0, 0], sizes = [8, 512], strides = [1, 1]} : vector<32x512xf32> to vector<8x512xf32>
    %80 = arith.addf %78, %79 : vector<8x512xf32>
    %81 = vector.extract_strided_slice %74 {offsets = [8, 0], sizes = [8, 512], strides = [1, 1]} : vector<32x512xf32> to vector<8x512xf32>
    %82 = arith.mulf %81, %80 : vector<8x512xf32>
    %83 = vector.extract_strided_slice %75 {offsets = [8, 0], sizes = [8, 512], strides = [1, 1]} : vector<32x512xf32> to vector<8x512xf32>
    %84 = arith.addf %82, %83 : vector<8x512xf32>
    %85 = vector.extract_strided_slice %74 {offsets = [16, 0], sizes = [8, 512], strides = [1, 1]} : vector<32x512xf32> to vector<8x512xf32>
    %86 = arith.mulf %85, %84 : vector<8x512xf32>
    %87 = vector.extract_strided_slice %75 {offsets = [16, 0], sizes = [8, 512], strides = [1, 1]} : vector<32x512xf32> to vector<8x512xf32>
    %88 = arith.addf %86, %87 : vector<8x512xf32>
    %89 = vector.extract_strided_slice %74 {offsets = [24, 0], sizes = [8, 512], strides = [1, 1]} : vector<32x512xf32> to vector<8x512xf32>
    %90 = arith.mulf %89, %88 : vector<8x512xf32>
    %91 = vector.extract_strided_slice %75 {offsets = [24, 0], sizes = [8, 512], strides = [1, 1]} : vector<32x512xf32> to vector<8x512xf32>
    %92 = arith.addf %90, %91 : vector<8x512xf32>
    %93 = tpu.concatenate %80, %84, %88, %92 in 0 : vector<8x512xf32>, vector<8x512xf32>, vector<8x512xf32>, vector<8x512xf32> -> vector<32x512xf32>
    %94 = arith.mulf %93, %56 : vector<32x512xf32>
    %95 = vector.extract_strided_slice %94 {offsets = [0, 0], sizes = [32, 64], strides = [1, 1]} : vector<32x512xf32> to vector<32x64xf32>
    %96 = vector.extract_strided_slice %94 {offsets = [0, 64], sizes = [32, 64], strides = [1, 1]} : vector<32x512xf32> to vector<32x64xf32>
    %97 = arith.addf %95, %96 : vector<32x64xf32>
    %98 = vector.extract_strided_slice %94 {offsets = [0, 128], sizes = [32, 64], strides = [1, 1]} : vector<32x512xf32> to vector<32x64xf32>
    %99 = arith.addf %97, %98 : vector<32x64xf32>
    %100 = vector.extract_strided_slice %94 {offsets = [0, 192], sizes = [32, 64], strides = [1, 1]} : vector<32x512xf32> to vector<32x64xf32>
    %101 = arith.addf %99, %100 : vector<32x64xf32>
    %102 = vector.extract_strided_slice %94 {offsets = [0, 256], sizes = [32, 64], strides = [1, 1]} : vector<32x512xf32> to vector<32x64xf32>
    %103 = arith.addf %101, %102 : vector<32x64xf32>
    %104 = vector.extract_strided_slice %94 {offsets = [0, 320], sizes = [32, 64], strides = [1, 1]} : vector<32x512xf32> to vector<32x64xf32>
    %105 = arith.addf %103, %104 : vector<32x64xf32>
    %106 = vector.extract_strided_slice %94 {offsets = [0, 384], sizes = [32, 64], strides = [1, 1]} : vector<32x512xf32> to vector<32x64xf32>
    %107 = arith.addf %105, %106 : vector<32x64xf32>
    %108 = vector.extract_strided_slice %94 {offsets = [0, 448], sizes = [32, 64], strides = [1, 1]} : vector<32x512xf32> to vector<32x64xf32>
    %109 = arith.addf %107, %108 : vector<32x64xf32>
    %c0_22 = arith.constant 0 : index
    %c0_23 = arith.constant 0 : index
    %110 = vector.load %arg8[%c0_22, %c0_23] : memref<1x64xf32, #tpu.memory_space<vmem>>, vector<1x64xf32>
    %111 = vector.broadcast %110 : vector<1x64xf32> to vector<32x64xf32>
    %112 = arith.mulf %111, %51 : vector<32x64xf32>
    %113 = arith.addf %109, %112 : vector<32x64xf32>
    %cst_24 = arith.constant 0.000000e+00 : f32
    %114 = vector.broadcast %cst_24 : f32 to vector<32x64xf32>
    %115 = arith.subf %114, %20 : vector<32x64xf32>
    %116 = math.exp %115 : vector<32x64xf32>
    %cst_25 = arith.constant 1.000000e+00 : f32
    %117 = vector.broadcast %cst_25 : f32 to vector<32x64xf32>
    %118 = arith.addf %117, %116 : vector<32x64xf32>
    %119 = tpu.reciprocal %118 {approx = true} : vector<32x64xf32> -> vector<32x64xf32>
    %120 = arith.mulf %20, %119 : vector<32x64xf32>
    %121 = arith.mulf %113, %120 : vector<32x64xf32>
    %122 = arith.truncf %121 : vector<32x64xf32> to vector<32x64xbf16>
    %c0_26 = arith.constant 0 : index
    %c0_27 = arith.constant 0 : index
    %123 = vector.load %arg9[%c0_26, %c0_27] : memref<64x128xbf16, #tpu.memory_space<vmem>>, vector<64x128xbf16>
    %cst_28 = arith.constant dense<0.000000e+00> : vector<32x128xf32>
    %124 = tpu.matmul %122, %123, %cst_28 {dimension_numbers = #tpu.dot_dimension_numbers<[1], [0], [0], [1], [0, 0, 1, 1], [], []>} : vector<32x64xbf16>, vector<64x128xbf16>, vector<32x128xf32> -> vector<32x128xf32>
    %125 = vector.extract_strided_slice %124 {offsets = [0, 0], sizes = [32, 64], strides = [1, 1]} : vector<32x128xf32> to vector<32x64xf32>
    %126 = vector.extract_strided_slice %124 {offsets = [0, 64], sizes = [32, 64], strides = [1, 1]} : vector<32x128xf32> to vector<32x64xf32>
    %c0_29 = arith.constant 0 : index
    %c0_30 = arith.constant 0 : index
    %127 = vector.load %arg10[%c0_29, %c0_30] : memref<4x64xf32, #tpu.memory_space<vmem>>, vector<4x64xf32>
    %cst_31 = arith.constant 0.000000e+00 : f32
    %128 = vector.broadcast %cst_31 : f32 to vector<24x64xf32>
    %129 = tpu.concatenate %128, %125 in 0 : vector<24x64xf32>, vector<32x64xf32> -> vector<56x64xf32>
    %c0_32 = arith.constant 0 : index
    %c0_33 = arith.constant 0 : index
    %130 = vector.load %arg11[%c0_32, %c0_33] : memref<1x64xf32, #tpu.memory_space<vmem>>, vector<1x64xf32>
    %131 = vector.extract_strided_slice %127 {offsets = [3, 0], sizes = [1, 64], strides = [1, 1]} : vector<4x64xf32> to vector<1x64xf32>
    %132 = vector.broadcast %131 : vector<1x64xf32> to vector<32x64xf32>
    %133 = arith.mulf %132, %125 : vector<32x64xf32>
    %134 = vector.broadcast %130 : vector<1x64xf32> to vector<32x64xf32>
    %135 = arith.addf %134, %133 : vector<32x64xf32>
    %136 = vector.extract_strided_slice %127 {offsets = [2, 0], sizes = [1, 64], strides = [1, 1]} : vector<4x64xf32> to vector<1x64xf32>
    %137 = vector.extract_strided_slice %129 {offsets = [16, 0], sizes = [32, 64], strides = [1, 1]} : vector<56x64xf32> to vector<32x64xf32>
    %138 = vector.broadcast %136 : vector<1x64xf32> to vector<32x64xf32>
    %139 = arith.mulf %138, %137 : vector<32x64xf32>
    %140 = arith.addf %135, %139 : vector<32x64xf32>
    %141 = vector.extract_strided_slice %127 {offsets = [1, 0], sizes = [1, 64], strides = [1, 1]} : vector<4x64xf32> to vector<1x64xf32>
    %142 = vector.extract_strided_slice %129 {offsets = [8, 0], sizes = [32, 64], strides = [1, 1]} : vector<56x64xf32> to vector<32x64xf32>
    %143 = vector.broadcast %141 : vector<1x64xf32> to vector<32x64xf32>
    %144 = arith.mulf %143, %142 : vector<32x64xf32>
    %145 = arith.addf %140, %144 : vector<32x64xf32>
    %146 = vector.extract_strided_slice %127 {offsets = [0, 0], sizes = [1, 64], strides = [1, 1]} : vector<4x64xf32> to vector<1x64xf32>
    %147 = vector.extract_strided_slice %129 {offsets = [0, 0], sizes = [32, 64], strides = [1, 1]} : vector<56x64xf32> to vector<32x64xf32>
    %148 = vector.broadcast %146 : vector<1x64xf32> to vector<32x64xf32>
    %149 = arith.mulf %148, %147 : vector<32x64xf32>
    %150 = arith.addf %145, %149 : vector<32x64xf32>
    %cst_34 = arith.constant 0.000000e+00 : f32
    %151 = vector.broadcast %cst_34 : f32 to vector<32x64xf32>
    %152 = arith.subf %151, %150 : vector<32x64xf32>
    %153 = math.exp %152 : vector<32x64xf32>
    %cst_35 = arith.constant 1.000000e+00 : f32
    %154 = vector.broadcast %cst_35 : f32 to vector<32x64xf32>
    %155 = arith.addf %154, %153 : vector<32x64xf32>
    %156 = tpu.reciprocal %155 {approx = true} : vector<32x64xf32> -> vector<32x64xf32>
    %157 = arith.mulf %150, %156 : vector<32x64xf32>
    %158 = arith.truncf %157 : vector<32x64xf32> to vector<32x64xbf16>
    %c0_36 = arith.constant 0 : index
    %c0_37 = arith.constant 0 : index
    %159 = vector.load %arg12[%c0_36, %c0_37] : memref<64x1088xbf16, #tpu.memory_space<vmem>>, vector<64x1088xbf16>
    %cst_38 = arith.constant dense<0.000000e+00> : vector<32x1088xf32>
    %160 = tpu.matmul %158, %159, %cst_38 {dimension_numbers = #tpu.dot_dimension_numbers<[1], [0], [0], [1], [0, 0, 1, 1], [], []>} : vector<32x64xbf16>, vector<64x1088xbf16>, vector<32x1088xf32> -> vector<32x1088xf32>
    %161 = vector.extract_strided_slice %160 {offsets = [0, 0], sizes = [32, 512], strides = [1, 1]} : vector<32x1088xf32> to vector<32x512xf32>
    %162 = vector.extract_strided_slice %160 {offsets = [0, 512], sizes = [32, 512], strides = [1, 1]} : vector<32x1088xf32> to vector<32x512xf32>
    %163 = vector.extract_strided_slice %160 {offsets = [0, 1024], sizes = [32, 64], strides = [1, 1]} : vector<32x1088xf32> to vector<32x64xf32>
    %c0_39 = arith.constant 0 : index
    %c0_40 = arith.constant 0 : index
    %164 = vector.load %arg13[%c0_39, %c0_40] : memref<1x64xf32, #tpu.memory_space<vmem>>, vector<1x64xf32>
    %165 = vector.broadcast %164 : vector<1x64xf32> to vector<32x64xf32>
    %166 = arith.addf %163, %165 : vector<32x64xf32>
    %cst_41 = arith.constant 2.000000e+01 : f32
    %167 = vector.broadcast %cst_41 : f32 to vector<32x64xf32>
    %168 = arith.cmpf ogt, %166, %167 : vector<32x64xf32>
    %cst_42 = arith.constant 2.000000e+01 : f32
    %169 = vector.broadcast %cst_42 : f32 to vector<32x64xf32>
    %170 = arith.minimumf %166, %169 : vector<32x64xf32>
    %171 = math.exp %170 : vector<32x64xf32>
    %172 = math.log1p %171 : vector<32x64xf32>
    %173 = arith.select %168, %166, %172 : vector<32x64xi1>, vector<32x64xf32>
    %174 = tpu.concatenate %173, %173, %173, %173, %173, %173, %173, %173 in 1 : vector<32x64xf32>, vector<32x64xf32>, vector<32x64xf32>, vector<32x64xf32>, vector<32x64xf32>, vector<32x64xf32>, vector<32x64xf32>, vector<32x64xf32> -> vector<32x512xf32>
    %175 = arith.mulf %173, %157 : vector<32x64xf32>
    %176 = tpu.concatenate %175, %175, %175, %175, %175, %175, %175, %175 in 1 : vector<32x64xf32>, vector<32x64xf32>, vector<32x64xf32>, vector<32x64xf32>, vector<32x64xf32>, vector<32x64xf32>, vector<32x64xf32>, vector<32x64xf32> -> vector<32x512xf32>
    %c0_43 = arith.constant 0 : index
    %c0_44 = arith.constant 0 : index
    %177 = vector.load %arg14[%c0_43, %c0_44] : memref<1x512xf32, #tpu.memory_space<vmem>>, vector<1x512xf32>
    %178 = vector.broadcast %177 : vector<1x512xf32> to vector<32x512xf32>
    %179 = arith.mulf %174, %178 : vector<32x512xf32>
    %180 = math.exp %179 : vector<32x512xf32>
    %181 = arith.mulf %176, %161 : vector<32x512xf32>
    %cst_45 = arith.constant 0.000000e+00 : f32
    %182 = vector.broadcast %cst_45 : f32 to vector<8x512xf32>
    %183 = vector.extract_strided_slice %180 {offsets = [0, 0], sizes = [8, 512], strides = [1, 1]} : vector<32x512xf32> to vector<8x512xf32>
    %184 = arith.mulf %183, %182 : vector<8x512xf32>
    %185 = vector.extract_strided_slice %181 {offsets = [0, 0], sizes = [8, 512], strides = [1, 1]} : vector<32x512xf32> to vector<8x512xf32>
    %186 = arith.addf %184, %185 : vector<8x512xf32>
    %187 = vector.extract_strided_slice %180 {offsets = [8, 0], sizes = [8, 512], strides = [1, 1]} : vector<32x512xf32> to vector<8x512xf32>
    %188 = arith.mulf %187, %186 : vector<8x512xf32>
    %189 = vector.extract_strided_slice %181 {offsets = [8, 0], sizes = [8, 512], strides = [1, 1]} : vector<32x512xf32> to vector<8x512xf32>
    %190 = arith.addf %188, %189 : vector<8x512xf32>
    %191 = vector.extract_strided_slice %180 {offsets = [16, 0], sizes = [8, 512], strides = [1, 1]} : vector<32x512xf32> to vector<8x512xf32>
    %192 = arith.mulf %191, %190 : vector<8x512xf32>
    %193 = vector.extract_strided_slice %181 {offsets = [16, 0], sizes = [8, 512], strides = [1, 1]} : vector<32x512xf32> to vector<8x512xf32>
    %194 = arith.addf %192, %193 : vector<8x512xf32>
    %195 = vector.extract_strided_slice %180 {offsets = [24, 0], sizes = [8, 512], strides = [1, 1]} : vector<32x512xf32> to vector<8x512xf32>
    %196 = arith.mulf %195, %194 : vector<8x512xf32>
    %197 = vector.extract_strided_slice %181 {offsets = [24, 0], sizes = [8, 512], strides = [1, 1]} : vector<32x512xf32> to vector<8x512xf32>
    %198 = arith.addf %196, %197 : vector<8x512xf32>
    %199 = tpu.concatenate %186, %190, %194, %198 in 0 : vector<8x512xf32>, vector<8x512xf32>, vector<8x512xf32>, vector<8x512xf32> -> vector<32x512xf32>
    %200 = arith.mulf %199, %162 : vector<32x512xf32>
    %201 = vector.extract_strided_slice %200 {offsets = [0, 0], sizes = [32, 64], strides = [1, 1]} : vector<32x512xf32> to vector<32x64xf32>
    %202 = vector.extract_strided_slice %200 {offsets = [0, 64], sizes = [32, 64], strides = [1, 1]} : vector<32x512xf32> to vector<32x64xf32>
    %203 = arith.addf %201, %202 : vector<32x64xf32>
    %204 = vector.extract_strided_slice %200 {offsets = [0, 128], sizes = [32, 64], strides = [1, 1]} : vector<32x512xf32> to vector<32x64xf32>
    %205 = arith.addf %203, %204 : vector<32x64xf32>
    %206 = vector.extract_strided_slice %200 {offsets = [0, 192], sizes = [32, 64], strides = [1, 1]} : vector<32x512xf32> to vector<32x64xf32>
    %207 = arith.addf %205, %206 : vector<32x64xf32>
    %208 = vector.extract_strided_slice %200 {offsets = [0, 256], sizes = [32, 64], strides = [1, 1]} : vector<32x512xf32> to vector<32x64xf32>
    %209 = arith.addf %207, %208 : vector<32x64xf32>
    %210 = vector.extract_strided_slice %200 {offsets = [0, 320], sizes = [32, 64], strides = [1, 1]} : vector<32x512xf32> to vector<32x64xf32>
    %211 = arith.addf %209, %210 : vector<32x64xf32>
    %212 = vector.extract_strided_slice %200 {offsets = [0, 384], sizes = [32, 64], strides = [1, 1]} : vector<32x512xf32> to vector<32x64xf32>
    %213 = arith.addf %211, %212 : vector<32x64xf32>
    %214 = vector.extract_strided_slice %200 {offsets = [0, 448], sizes = [32, 64], strides = [1, 1]} : vector<32x512xf32> to vector<32x64xf32>
    %215 = arith.addf %213, %214 : vector<32x64xf32>
    %c0_46 = arith.constant 0 : index
    %c0_47 = arith.constant 0 : index
    %216 = vector.load %arg15[%c0_46, %c0_47] : memref<1x64xf32, #tpu.memory_space<vmem>>, vector<1x64xf32>
    %217 = vector.broadcast %216 : vector<1x64xf32> to vector<32x64xf32>
    %218 = arith.mulf %217, %157 : vector<32x64xf32>
    %219 = arith.addf %215, %218 : vector<32x64xf32>
    %cst_48 = arith.constant 0.000000e+00 : f32
    %220 = vector.broadcast %cst_48 : f32 to vector<32x64xf32>
    %221 = arith.subf %220, %126 : vector<32x64xf32>
    %222 = math.exp %221 : vector<32x64xf32>
    %cst_49 = arith.constant 1.000000e+00 : f32
    %223 = vector.broadcast %cst_49 : f32 to vector<32x64xf32>
    %224 = arith.addf %223, %222 : vector<32x64xf32>
    %225 = tpu.reciprocal %224 {approx = true} : vector<32x64xf32> -> vector<32x64xf32>
    %226 = arith.mulf %126, %225 : vector<32x64xf32>
    %227 = arith.mulf %219, %226 : vector<32x64xf32>
    %228 = vector.extract_strided_slice %227 {offsets = [0, 0], sizes = [8, 64], strides = [1, 1]} : vector<32x64xf32> to vector<8x64xf32>
    %229 = vector.extract_strided_slice %227 {offsets = [8, 0], sizes = [8, 64], strides = [1, 1]} : vector<32x64xf32> to vector<8x64xf32>
    %230 = vector.extract_strided_slice %227 {offsets = [16, 0], sizes = [8, 64], strides = [1, 1]} : vector<32x64xf32> to vector<8x64xf32>
    %231 = vector.extract_strided_slice %227 {offsets = [24, 0], sizes = [8, 64], strides = [1, 1]} : vector<32x64xf32> to vector<8x64xf32>
    %232 = tpu.concatenate %228, %229, %230, %231 in 1 : vector<8x64xf32>, vector<8x64xf32>, vector<8x64xf32>, vector<8x64xf32> -> vector<8x256xf32>
    %233 = arith.truncf %232 : vector<8x256xf32> to vector<8x256xbf16>
    %c0_50 = arith.constant 0 : index
    %c0_51 = arith.constant 0 : index
    %234 = vector.load %arg16[%c0_50, %c0_51] : memref<256x8xbf16, #tpu.memory_space<vmem>>, vector<256x8xbf16>
    %cst_52 = arith.constant dense<0.000000e+00> : vector<8x8xf32>
    %235 = tpu.matmul %233, %234, %cst_52 {dimension_numbers = #tpu.dot_dimension_numbers<[1], [0], [0], [1], [0, 0, 1, 1], [], []>} : vector<8x256xbf16>, vector<256x8xbf16>, vector<8x8xf32> -> vector<8x8xf32>
    %c0_53 = arith.constant 0 : index
    %c0_54 = arith.constant 0 : index
    %236 = vector.load %arg17[%c0_53, %c0_54] : memref<1x8xf32, #tpu.memory_space<vmem>>, vector<1x8xf32>
    %237 = vector.broadcast %236 : vector<1x8xf32> to vector<8x8xf32>
    %238 = arith.addf %235, %237 : vector<8x8xf32>
    %c0_55 = arith.constant 0 : index
    %c0_56 = arith.constant 0 : index
    %239 = vector.load %arg18[%c0_55, %c0_56] : memref<8x8xf32, #tpu.memory_space<vmem>>, vector<8x8xf32>
    tpu.vector_store %arg18[%c0_55, %c0_56], %238 {strides = array<i32>} : memref<8x8xf32, #tpu.memory_space<vmem>>, vector<8x8xf32>,
    return
  }
}

</mosaic_0001>

<llo_original>
// kernel: forward.1
$region0: #{forward.1}
  #allocation0 [shape = 'u32[]', space=smem, size = 0x4, offset = 0x4, fixed_abs, tag = 'smem constant byte address 0x4 - core index']
  #allocation1 [shape = 'u32[144,128]{1,0:T(1,128)}', space=vmem, size = 0x12000, scoped, tag = 'internal scratch']
  %s0 = inlined_call_operand.vmem [shape: f32[32,16], index: 0, kind: input, shape index: {}]
  %s1 = inlined_call_operand.vmem [shape: f32[4,128], index: 1, kind: input, shape index: {}]
  %s2 = inlined_call_operand.vmem [shape: bf16[16,128], index: 2, kind: input, shape index: {}]
  %s3 = inlined_call_operand.vmem [shape: f32[4,64], index: 3, kind: input, shape index: {}]
  %s4 = inlined_call_operand.vmem [shape: f32[1,64], index: 4, kind: input, shape index: {}]
  %s5 = inlined_call_operand.vmem [shape: bf16[64,1088], index: 5, kind: input, shape index: {}]
  %s6 = inlined_call_operand.vmem [shape: f32[1,64], index: 6, kind: input, shape index: {}]
  %s7 = inlined_call_operand.vmem [shape: f32[1,512], index: 7, kind: input, shape index: {}]
  %s8 = inlined_call_operand.vmem [shape: f32[1,64], index: 8, kind: input, shape index: {}]
  %s9 = inlined_call_operand.vmem [shape: bf16[64,128], index: 9, kind: input, shape index: {}]
  %s10 = inlined_call_operand.vmem [shape: f32[4,64], index: 10, kind: input, shape index: {}]
  %s11 = inlined_call_operand.vmem [shape: f32[1,64], index: 11, kind: input, shape index: {}]
  %s12 = inlined_call_operand.hbm [shape: bf16[64,1088], index: 12, kind: input, shape index: {}]
  %s13 = inlined_call_operand.vmem [shape: f32[1,64], index: 13, kind: input, shape index: {}]
  %s14 = inlined_call_operand.vmem [shape: f32[1,512], index: 14, kind: input, shape index: {}]
  %s15 = inlined_call_operand.vmem [shape: f32[1,64], index: 15, kind: input, shape index: {}]
  %s16 = inlined_call_operand.vmem [shape: bf16[256,8], index: 16, kind: input, shape index: {}]
  %s17 = inlined_call_operand.vmem [shape: f32[1,8], index: 17, kind: input, shape index: {}]
  %s18 = inlined_call_operand.vmem [shape: f32[8,8], index: 18, kind: output, shape index: {}]
  %s19 = sld [smem:[#allocation0]]
  $region86: #{forward.1} parent=0
    _
  %s21 = ssub.s32 1, %s19
  %s22 = scalar_select 0, %s21, %s19
  $region1: #{forward.1} parent=0
    #allocation2 [shape = 'u8[147456]{0}', space=vmem, size = 0x24000, scoped, tag = 'input window, operand 12, single buffered']
    #allocation3 [shape = 's32[1]{0}', space=sflag, size = 0x4, scoped, tag = 'scoped memory for forward.1']
    %23 = vsyncpa [#allocation3], 0
    // Predicated region
    $region2: #{forward.1} parent=1 // pred_check
      _
    $region3: #{forward.1} parent=1 // pred_check_branch
      %25 = sbr.rel (0) target = $region5
    $region4: #{forward.1} parent=1 // pred_region
      _
    $region5: #{forward.1} parent=1 // pred_fallthru
      _
    // Predicated region
    $region6: #{forward.1} parent=1 // pred_check
      _
    $region7: #{forward.1} parent=1 // pred_check_branch
      %27 = sbr.rel (0) target = $region9
    $region8: #{forward.1} parent=1 // pred_region
      _
    $region9: #{forward.1} parent=1 // pred_fallthru
      _
    // Predicated region
    $region10: #{forward.1} parent=1 // pred_check
      _
    $region11: #{forward.1} parent=1 // pred_check_branch
      %29 = sbr.rel (0) target = $region13
    $region12: #{forward.1} parent=1 // pred_region
      _
    $region13: #{forward.1} parent=1 // pred_fallthru
      _
    // Predicated region
    $region14: #{forward.1} parent=1 // pred_check
      _
    $region15: #{forward.1} parent=1 // pred_check_branch
      %31 = sbr.rel (0) target = $region17
    $region16: #{forward.1} parent=1 // pred_region
      _
    $region17: #{forward.1} parent=1 // pred_fallthru
      _
    // Predicated region
    $region18: #{forward.1} parent=1 // pred_check
      _
    $region19: #{forward.1} parent=1 // pred_check_branch
      %33 = sbr.rel (0) target = $region21
    $region20: #{forward.1} parent=1 // pred_region
      _
    $region21: #{forward.1} parent=1 // pred_fallthru
      _
    // Predicated region
    $region22: #{forward.1} parent=1 // pred_check
      _
    $region23: #{forward.1} parent=1 // pred_check_branch
      %35 = sbr.rel (0) target = $region25
    $region24: #{forward.1} parent=1 // pred_region
      _
    $region25: #{forward.1} parent=1 // pred_fallthru
      _
    // Predicated region
    $region26: #{forward.1} parent=1 // pred_check
      _
    $region27: #{forward.1} parent=1 // pred_check_branch
      %37 = sbr.rel (0) target = $region29
    $region28: #{forward.1} parent=1 // pred_region
      _
    $region29: #{forward.1} parent=1 // pred_fallthru
      _
    // Predicated region
    $region30: #{forward.1} parent=1 // pred_check
      _
    $region31: #{forward.1} parent=1 // pred_check_branch
      %39 = sbr.rel (0) target = $region33
    $region32: #{forward.1} parent=1 // pred_region
      _
    $region33: #{forward.1} parent=1 // pred_fallthru
      _
    // Predicated region
    $region34: #{forward.1} parent=1 // pred_check
      _
    $region35: #{forward.1} parent=1 // pred_check_branch
      %41 = sbr.rel (0) target = $region37
    $region36: #{forward.1} parent=1 // pred_region
      _
    $region37: #{forward.1} parent=1 // pred_fallthru
      _
    // Predicated region
    $region38: #{forward.1} parent=1 // pred_check
      _
    $region39: #{forward.1} parent=1 // pred_check_branch
      %43 = sbr.rel (0) target = $region41
    $region40: #{forward.1} parent=1 // pred_region
      _
    $region41: #{forward.1} parent=1 // pred_fallthru
      _
    // Predicated region
    $region42: #{forward.1} parent=1 // pred_check
      _
    $region43: #{forward.1} parent=1 // pred_check_branch
      %45 = sbr.rel (0) target = $region45
    $region44: #{forward.1} parent=1 // pred_region
      _
    $region45: #{forward.1} parent=1 // pred_fallthru
      _
    // Predicated region
    $region46: #{forward.1} parent=1 // pred_check
      _
    $region47: #{forward.1} parent=1 // pred_check_branch
      %47 = sbr.rel (0) target = $region49
    $region48: #{forward.1} parent=1 // pred_region
      _
    $region49: #{forward.1} parent=1 // pred_fallthru
      _
    // Predicated region
    $region50: #{forward.1} parent=1 // pred_check
      _
    $region51: #{forward.1} parent=1 // pred_check_branch
      %49 = sbr.rel (0) target = $region53
    $region52: #{forward.1} parent=1 // pred_region
      %s51 = ssub.s32 4608, 4608
      %52 = vsyncadd [#allocation3], %s51
      %s53 = sshll.u32 [#allocation2], 4
      %s54 = int_to_ptr.vmem [resolvable:$true] %s53
      %59 = dma.hbm_to_vmem [thread:$0]  %s12, 4608, %s54, [#allocation3], 576, 576, 36
    $region53: #{forward.1} parent=1 // pred_fallthru
      _
    // Predicated region
    $region54: #{forward.1} parent=1 // pred_check
      _
    $region55: #{forward.1} parent=1 // pred_check_branch
      %61 = sbr.rel (0) target = $region57
    $region56: #{forward.1} parent=1 // pred_region
      _
    $region57: #{forward.1} parent=1 // pred_fallthru
      _
    // Predicated region
    $region58: #{forward.1} parent=1 // pred_check
      _
    $region59: #{forward.1} parent=1 // pred_check_branch
      %63 = sbr.rel (0) target = $region61
    $region60: #{forward.1} parent=1 // pred_region
      _
    $region61: #{forward.1} parent=1 // pred_fallthru
      _
    // Predicated region
    $region62: #{forward.1} parent=1 // pred_check
      _
    $region63: #{forward.1} parent=1 // pred_check_branch
      %65 = sbr.rel (0) target = $region65
    $region64: #{forward.1} parent=1 // pred_region
      _
    $region65: #{forward.1} parent=1 // pred_fallthru
      _
    // Predicated region
    $region66: #{forward.1} parent=1 // pred_check
      _
    $region67: #{forward.1} parent=1 // pred_check_branch
      %67 = sbr.rel (0) target = $region69
    $region68: #{forward.1} parent=1 // pred_region
      _
    $region69: #{forward.1} parent=1 // pred_fallthru
      _
    // Predicated region
    $region70: #{forward.1} parent=1 // pred_check
      _
    $region71: #{forward.1} parent=1 // pred_check_branch
      %69 = sbr.rel (0) target = $region73
    $region72: #{forward.1} parent=1 // pred_region
      _
    $region73: #{forward.1} parent=1 // pred_fallthru
      _
    // Predicated region
    $region74: #{forward.1} parent=1 // pred_check
      _
    $region75: #{forward.1} parent=1 // pred_check_branch
      %71 = sbr.rel (0) target = $region77
    $region76: #{forward.1} parent=1 // pred_region
      %72 = dma.done [#allocation3], 4608
    $region77: #{forward.1} parent=1 // pred_fallthru
      _
    %v74 = vld [vmem:[%s1] sm:$0xf]
    %v75 = vlaneseq
    %v76 = vshrl.u32 %v75, 7
    %v77 = vsub.s32 0, %v76
    %v78 = vrot.slane %v74, %v77
    %v79 = vlaneseq
    %v80 = vshrl.u32 %v79, 7
    %v81 = vsub.s32 1, %v80
    %v82 = vrot.slane %v74, %v81
    %v83 = vlaneseq
    %v84 = vshrl.u32 %v83, 7
    %v85 = vsub.s32 2, %v84
    %v86 = vrot.slane %v74, %v85
    %v87 = vlaneseq
    %v88 = vshrl.u32 %v87, 7
    %v89 = vsub.s32 3, %v88
    %v90 = vrot.slane %v74, %v89
    %v91 = vld [vmem:[%s0] sm:$0xff]
    %v92 = vld [vmem:[%s0 + $0x8] sm:$0xff]
    %v93 = vld [vmem:[%s0 + $0x10] sm:$0xff]
    %v94 = vld [vmem:[%s0 + $0x18] sm:$0xff]
    %v95 = vpack.c.bf16 %v92, %v91
    %v96 = vpack.c.bf16 %v94, %v93
    %v97 = vld [vmem:[%s2] sm:$0xf]
    %v98 = vld [vmem:[%s2 + $0x4] sm:$0xf]
    %v101 = vunpack.c.l.b16 %v97
    %v102 = vunpack.c.l.b16 %v98
    %v103 = vpack.c.b16 %v102, %v101
    %vm105 = vcmask 130048
    %v107 = vsel %vm105, %v95, 0
    %v110 = vsel %vm105, %v96, 0
    %112 = vmatprep.subr.bf16.mxu0 0
    %113 = vmatpush1.bf16.msra.mxu0 %v103
    %114 = vmatprep.subr.bf16.mxu0 0
    %115 = vmatpush1.bf16.msra.mxu0 0
    %116 = vmatprep.subr.bf16.mxu0 0
    %117 = vmatpush1.bf16.msra.mxu0 0
    %118 = vmatprep.subr.bf16.mxu0 0
    %119 = vmatpush1.bf16.msra.mxu0 0
    %120 = vmatprep.subr.bf16.mxu0 0
    %121 = vmatpush1.bf16.msra.mxu0 0
    %122 = vmatprep.subr.bf16.mxu0 0
    %123 = vmatpush1.bf16.msra.mxu0 0
    %124 = vmatprep.subr.bf16.mxu0 0
    %125 = vmatpush1.bf16.msra.mxu0 0
    %126 = vmatprep.subr.bf16.mxu0 0
    %127 = vmatpush1.bf16.msra.mxu0 0
    %128 = vmatprep.subr.bf16.mxu0 0
    %129 = vmatpush1.bf16.msra.mxu0 0
    %130 = vmatprep.subr.bf16.mxu0 0
    %131 = vmatpush1.bf16.msra.mxu0 0
    %132 = vmatprep.subr.bf16.mxu0 0
    %133 = vmatpush1.bf16.msra.mxu0 0
    %134 = vmatprep.subr.bf16.mxu0 0
    %135 = vmatpush1.bf16.msra.mxu0 0
    %136 = vmatprep.subr.bf16.mxu0 0
    %137 = vmatpush1.bf16.msra.mxu0 0
    %138 = vmatprep.subr.bf16.mxu0 0
    %139 = vmatpush1.bf16.msra.mxu0 0
    %140 = vmatprep.subr.bf16.mxu0 0
    %141 = vmatpush1.bf16.msra.mxu0 0
    %142 = vmatprep.subr.bf16.mxu0 0
    %143 = vmatpush1.bf16.msra.mxu0 0
    %144 = vmatprep.mubr.bf16.mxu0 0
    %145 = vmatmul.mubr.bf16.gmra.mrb[0].mxu0 %v107
    %v146 = vpop.f32.mrb[0].mxu0
    %v147 = vadd.f32 %v78, %v146
    %v148 = vpop.f32.mrb[0].mxu0
    %v149 = vpop.f32.mrb[0].mxu0
    %v150 = vadd.f32 %v82, %v149
    %v151 = vpop.f32.mrb[0].mxu0
    %152 = vmatprep.mubr.bf16.mxu0 0
    %153 = vmatmul.mubr.bf16.gmra.mrb[0].mxu0 %v110
    %v154 = vpop.f32.mrb[0].mxu0
    %v155 = vadd.f32 %v86, %v154
    %v156 = vpop.f32.mrb[0].mxu0
    %v157 = vpop.f32.mrb[0].mxu0
    %v158 = vadd.f32 %v90, %v157
    %v159 = vpop.f32.mrb[0].mxu0
    %160 = vdwg.mxu0
    %v161 = vld [vmem:[%s3] sm:$0xf]
    %v162 = vld [vmem:[%s4] sm:$0x1]
    %v163 = vlaneseq
    %v164 = vshrl.u32 %v163, 7
    %v165 = vsub.s32 3, %v164
    %v166 = vrot.slane %v161, %v165
    %v167 = vmul.f32 %v166, %v147
    %v168 = vmul.f32 %v166, %v150
    %v169 = vmul.f32 %v166, %v155
    %v170 = vmul.f32 %v166, %v158
    %v172 = vlaneseq
    %v173 = vshrl.u32 %v172, 7
    %v174 = vsub.s32 0, %v173
    %v175 = vrot.slane %v162, %v174
    %v177 = vadd.f32 %v175, %v167
    %v178 = vadd.f32 %v175, %v168
    %v179 = vadd.f32 %v175, %v169
    %v180 = vadd.f32 %v175, %v170
    %v181 = vlaneseq
    %v182 = vshrl.u32 %v181, 7
    %v183 = vsub.s32 2, %v182
    %v184 = vrot.slane %v161, %v183
    %v185 = vmul.f32 %v184, 0.0
    %v186 = vmul.f32 %v184, %v147
    %v187 = vmul.f32 %v184, %v150
    %v188 = vmul.f32 %v184, %v155
    %v189 = vadd.f32 %v177, %v185
    %v190 = vadd.f32 %v178, %v186
    %v191 = vadd.f32 %v179, %v187
    %v192 = vadd.f32 %v180, %v188
    %v193 = vlaneseq
    %v194 = vshrl.u32 %v193, 7
    %v195 = vsub.s32 1, %v194
    %v196 = vrot.slane %v161, %v195
    %v197 = vmul.f32 %v196, 0.0
    %v198 = vmul.f32 %v196, %v147
    %v199 = vmul.f32 %v196, %v150
    %v200 = vadd.f32 %v189, %v197
    %v201 = vadd.f32 %v190, %v197
    %v202 = vadd.f32 %v191, %v198
    %v203 = vadd.f32 %v192, %v199
    %v204 = vlaneseq
    %v205 = vshrl.u32 %v204, 7
    %v206 = vsub.s32 0, %v205
    %v207 = vrot.slane %v161, %v206
    %v208 = vmul.f32 %v207, 0.0
    %v209 = vmul.f32 %v207, %v147
    %v210 = vadd.f32 %v200, %v208
    %v211 = vadd.f32 %v201, %v208
    %v212 = vadd.f32 %v202, %v208
    %v213 = vadd.f32 %v203, %v209
    %v214 = vsub.f32 0.0, %v210
    %v215 = vsub.f32 0.0, %v211
    %v216 = vsub.f32 0.0, %v212
    %v217 = vsub.f32 0.0, %v213
    %v218 = vmul.f32 %v214, 1.442695
    %v219 = vpow.pop %v218
    %v220 = vmul.f32 %v215, 1.442695
    %v221 = vpow.pop %v220
    %v222 = vmul.f32 %v216, 1.442695
    %v223 = vpow.pop %v222
    %v224 = vmul.f32 %v217, 1.442695
    %v225 = vpow.pop %v224
    %v226 = vadd.f32 %v219, 1.0
    %v227 = vadd.f32 %v221, 1.0
    %v228 = vadd.f32 %v223, 1.0
    %v229 = vadd.f32 %v225, 1.0
    %v230 = vrcp.pop %v226
    %v231 = vrcp.pop %v227
    %v232 = vrcp.pop %v228
    %v233 = vrcp.pop %v229
    %v234 = vmul.f32 %v210, %v230
    %v235 = vmul.f32 %v211, %v231
    %v236 = vmul.f32 %v212, %v232
    %v237 = vmul.f32 %v213, %v233
    %v238 = vpack.c.bf16 %v235, %v234
    %v239 = vpack.c.bf16 %v237, %v236
    %v240 = vld [vmem:[%s5] sm:$0xff]
    %v241 = vld [vmem:[%s5 + $0x8] sm:$0xff]
    %v242 = vld [vmem:[%s5 + $0x10] sm:$0xff]
    %v243 = vld [vmem:[%s5 + $0x18] sm:$0xff]
    %v244 = vld [vmem:[%s5 + $0x20] sm:$0xf]
    %v245 = vld [vmem:[%s5 + $0x24] sm:$0xff]
    %v246 = vld [vmem:[%s5 + $0x2c] sm:$0xff]
    %v247 = vld [vmem:[%s5 + $0x34] sm:$0xff]
    %v248 = vld [vmem:[%s5 + $0x3c] sm:$0xff]
    %v249 = vld [vmem:[%s5 + $0x44] sm:$0xf]
    %v250 = vld [vmem:[%s5 + $0x48] sm:$0xff]
    %v251 = vld [vmem:[%s5 + $0x50] sm:$0xff]
    %v252 = vld [vmem:[%s5 + $0x58] sm:$0xff]
    %v253 = vld [vmem:[%s5 + $0x60] sm:$0xff]
    %v254 = vld [vmem:[%s5 + $0x68] sm:$0xf]
    %v255 = vld [vmem:[%s5 + $0x6c] sm:$0xff]
    %v256 = vld [vmem:[%s5 + $0x74] sm:$0xff]
    %v257 = vld [vmem:[%s5 + $0x7c] sm:$0xff]
    %v258 = vld [vmem:[%s5 + $0x84] sm:$0xff]
    %v259 = vld [vmem:[%s5 + $0x8c] sm:$0xf]
    %v260 = vld [vmem:[%s5 + $0x90] sm:$0xff]
    %v261 = vld [vmem:[%s5 + $0x98] sm:$0xff]
    %v262 = vld [vmem:[%s5 + $0xa0] sm:$0xff]
    %v263 = vld [vmem:[%s5 + $0xa8] sm:$0xff]
    %v264 = vld [vmem:[%s5 + $0xb0] sm:$0xf]
    %v265 = vld [vmem:[%s5 + $0xb4] sm:$0xff]
    %v266 = vld [vmem:[%s5 + $0xbc] sm:$0xff]
    %v267 = vld [vmem:[%s5 + $0xc4] sm:$0xff]
    %v268 = vld [vmem:[%s5 + $0xcc] sm:$0xff]
    %v269 = vld [vmem:[%s5 + $0xd4] sm:$0xf]
    %v270 = vld [vmem:[%s5 + $0xd8] sm:$0xff]
    %v271 = vld [vmem:[%s5 + $0xe0] sm:$0xff]
    %v272 = vld [vmem:[%s5 + $0xe8] sm:$0xff]
    %v273 = vld [vmem:[%s5 + $0xf0] sm:$0xff]
    %v274 = vld [vmem:[%s5 + $0xf8] sm:$0xf]
    %v275 = vld [vmem:[%s5 + $0xfc] sm:$0xff]
    %v276 = vld [vmem:[%s5 + $0x104] sm:$0xff]
    %v277 = vld [vmem:[%s5 + $0x10c] sm:$0xff]
    %v278 = vld [vmem:[%s5 + $0x114] sm:$0xff]
    %v279 = vld [vmem:[%s5 + $0x11c] sm:$0xf]
    %v320 = vunpack.c.l.b16 %v240
    %v321 = vunpack.c.h.b16 %v240
    %v322 = vunpack.c.l.b16 %v241
    %v323 = vunpack.c.h.b16 %v241
    %v324 = vunpack.c.l.b16 %v242
    %v325 = vunpack.c.h.b16 %v242
    %v326 = vunpack.c.l.b16 %v243
    %v327 = vunpack.c.h.b16 %v243
    %v328 = vunpack.c.l.b16 %v244
    %v329 = vunpack.c.l.b16 %v245
    %v330 = vunpack.c.h.b16 %v245
    %v331 = vunpack.c.l.b16 %v246
    %v332 = vunpack.c.h.b16 %v246
    %v333 = vunpack.c.l.b16 %v247
    %v334 = vunpack.c.h.b16 %v247
    %v335 = vunpack.c.l.b16 %v248
    %v336 = vunpack.c.h.b16 %v248
    %v337 = vunpack.c.l.b16 %v249
    %v338 = vunpack.c.l.b16 %v250
    %v339 = vunpack.c.h.b16 %v250
    %v340 = vunpack.c.l.b16 %v251
    %v341 = vunpack.c.h.b16 %v251
    %v342 = vunpack.c.l.b16 %v252
    %v343 = vunpack.c.h.b16 %v252
    %v344 = vunpack.c.l.b16 %v253
    %v345 = vunpack.c.h.b16 %v253
    %v346 = vunpack.c.l.b16 %v254
    %v347 = vunpack.c.l.b16 %v255
    %v348 = vunpack.c.h.b16 %v255
    %v349 = vunpack.c.l.b16 %v256
    %v350 = vunpack.c.h.b16 %v256
    %v351 = vunpack.c.l.b16 %v257
    %v352 = vunpack.c.h.b16 %v257
    %v353 = vunpack.c.l.b16 %v258
    %v354 = vunpack.c.h.b16 %v258
    %v355 = vunpack.c.l.b16 %v259
    %v356 = vunpack.c.l.b16 %v260
    %v357 = vunpack.c.h.b16 %v260
    %v358 = vunpack.c.l.b16 %v261
    %v359 = vunpack.c.h.b16 %v261
    %v360 = vunpack.c.l.b16 %v262
    %v361 = vunpack.c.h.b16 %v262
    %v362 = vunpack.c.l.b16 %v263
    %v363 = vunpack.c.h.b16 %v263
    %v364 = vunpack.c.l.b16 %v264
    %v365 = vunpack.c.l.b16 %v265
    %v366 = vunpack.c.h.b16 %v265
    %v367 = vunpack.c.l.b16 %v266
    %v368 = vunpack.c.h.b16 %v266
    %v369 = vunpack.c.l.b16 %v267
    %v370 = vunpack.c.h.b16 %v267
    %v371 = vunpack.c.l.b16 %v268
    %v372 = vunpack.c.h.b16 %v268
    %v373 = vunpack.c.l.b16 %v269
    %v374 = vunpack.c.l.b16 %v270
    %v375 = vunpack.c.h.b16 %v270
    %v376 = vunpack.c.l.b16 %v271
    %v377 = vunpack.c.h.b16 %v271
    %v378 = vunpack.c.l.b16 %v272
    %v379 = vunpack.c.h.b16 %v272
    %v380 = vunpack.c.l.b16 %v273
    %v381 = vunpack.c.h.b16 %v273
    %v382 = vunpack.c.l.b16 %v274
    %v383 = vunpack.c.l.b16 %v275
    %v384 = vunpack.c.h.b16 %v275
    %v385 = vunpack.c.l.b16 %v276
    %v386 = vunpack.c.h.b16 %v276
    %v387 = vunpack.c.l.b16 %v277
    %v388 = vunpack.c.h.b16 %v277
    %v389 = vunpack.c.l.b16 %v278
    %v390 = vunpack.c.h.b16 %v278
    %v391 = vunpack.c.l.b16 %v279
    %v392 = vpack.c.b16 %v329, %v320
    %v393 = vpack.c.b16 %v330, %v321
    %v394 = vpack.c.b16 %v331, %v322
    %v395 = vpack.c.b16 %v332, %v323
    %v396 = vpack.c.b16 %v333, %v324
    %v397 = vpack.c.b16 %v334, %v325
    %v398 = vpack.c.b16 %v335, %v326
    %v399 = vpack.c.b16 %v336, %v327
    %v400 = vpack.c.b16 %v337, %v328
    %v401 = vpack.c.b16 %v347, %v338
    %v402 = vpack.c.b16 %v348, %v339
    %v403 = vpack.c.b16 %v349, %v340
    %v404 = vpack.c.b16 %v350, %v341
    %v405 = vpack.c.b16 %v351, %v342
    %v406 = vpack.c.b16 %v352, %v343
    %v407 = vpack.c.b16 %v353, %v344
    %v408 = vpack.c.b16 %v354, %v345
    %v409 = vpack.c.b16 %v355, %v346
    %v410 = vpack.c.b16 %v365, %v356
    %v411 = vpack.c.b16 %v366, %v357
    %v412 = vpack.c.b16 %v367, %v358
    %v413 = vpack.c.b16 %v368, %v359
    %v414 = vpack.c.b16 %v369, %v360
    %v415 = vpack.c.b16 %v370, %v361
    %v416 = vpack.c.b16 %v371, %v362
    %v417 = vpack.c.b16 %v372, %v363
    %v418 = vpack.c.b16 %v373, %v364
    %v419 = vpack.c.b16 %v383, %v374
    %v420 = vpack.c.b16 %v384, %v375
    %v421 = vpack.c.b16 %v385, %v376
    %v422 = vpack.c.b16 %v386, %v377
    %v423 = vpack.c.b16 %v387, %v378
    %v424 = vpack.c.b16 %v388, %v379
    %v425 = vpack.c.b16 %v389, %v380
    %v426 = vpack.c.b16 %v390, %v381
    %v427 = vpack.c.b16 %v391, %v382
    %vm464 = vcmask 523264
    %v466 = vsel %vm464, %v238, 0
    %v469 = vsel %vm464, %v239, 0
    %471 = vmatprep.subr.bf16.mxu0 %v393
    %472 = vmatpush1.bf16.msra.mxu0 %v392
    %473 = vmatprep.subr.bf16.mxu0 %v402
    %474 = vmatpush1.bf16.msra.mxu0 %v401
    %475 = vmatprep.subr.bf16.mxu0 %v411
    %476 = vmatpush1.bf16.msra.mxu0 %v410
    %477 = vmatprep.subr.bf16.mxu0 %v420
    %478 = vmatpush1.bf16.msra.mxu0 %v419
    %479 = vmatprep.subr.bf16.mxu0 0
    %480 = vmatpush1.bf16.msra.mxu0 0
    %481 = vmatprep.subr.bf16.mxu0 0
    %482 = vmatpush1.bf16.msra.mxu0 0
    %483 = vmatprep.subr.bf16.mxu0 0
    %484 = vmatpush1.bf16.msra.mxu0 0
    %485 = vmatprep.subr.bf16.mxu0 0
    %486 = vmatpush1.bf16.msra.mxu0 0
    %487 = vmatprep.subr.bf16.mxu0 0
    %488 = vmatpush1.bf16.msra.mxu0 0
    %489 = vmatprep.subr.bf16.mxu0 0
    %490 = vmatpush1.bf16.msra.mxu0 0
    %491 = vmatprep.subr.bf16.mxu0 0
    %492 = vmatpush1.bf16.msra.mxu0 0
    %493 = vmatprep.subr.bf16.mxu0 0
    %494 = vmatpush1.bf16.msra.mxu0 0
    %495 = vmatprep.subr.bf16.mxu0 0
    %496 = vmatpush1.bf16.msra.mxu0 0
    %497 = vmatprep.subr.bf16.mxu0 0
    %498 = vmatpush1.bf16.msra.mxu0 0
    %499 = vmatprep.subr.bf16.mxu0 0
    %500 = vmatpush1.bf16.msra.mxu0 0
    %501 = vmatprep.subr.bf16.mxu0 0
    %502 = vmatpush1.bf16.msra.mxu0 0
    %503 = vmatprep.mubr.bf16.mxu0 0
    %504 = vmatmul.mubr.bf16.gmra.mrb[0].mxu0 %v466
    %v505 = vpop.f32.mrb[0].mxu0
    %v506 = vadd.f32 0.0, %v505
    %v507 = vpop.f32.mrb[0].mxu0
    %v508 = vadd.f32 0.0, %v507
    %v509 = vpop.f32.mrb[0].mxu0
    %v510 = vadd.f32 0.0, %v509
    %v511 = vpop.f32.mrb[0].mxu0
    %v512 = vadd.f32 0.0, %v511
    %513 = vmatprep.mubr.bf16.mxu0 0
    %514 = vmatmul.mubr.bf16.gmra.mrb[0].mxu0 %v469
    %v515 = vpop.f32.mrb[0].mxu0
    %v516 = vadd.f32 0.0, %v515
    %v517 = vpop.f32.mrb[0].mxu0
    %v518 = vadd.f32 0.0, %v517
    %v519 = vpop.f32.mrb[0].mxu0
    %v520 = vadd.f32 0.0, %v519
    %v521 = vpop.f32.mrb[0].mxu0
    %v522 = vadd.f32 0.0, %v521
    %523 = vdwg.mxu0
    %524 = vmatprep.subr.bf16.mxu0 %v395
    %525 = vmatpush1.bf16.msra.mxu0 %v394
    %526 = vmatprep.subr.bf16.mxu0 %v404
    %527 = vmatpush1.bf16.msra.mxu0 %v403
    %528 = vmatprep.subr.bf16.mxu0 %v413
    %529 = vmatpush1.bf16.msra.mxu0 %v412
    %530 = vmatprep.subr.bf16.mxu0 %v422
    %531 = vmatpush1.bf16.msra.mxu0 %v421
    %532 = vmatprep.subr.bf16.mxu0 0
    %533 = vmatpush1.bf16.msra.mxu0 0
    %534 = vmatprep.subr.bf16.mxu0 0
    %535 = vmatpush1.bf16.msra.mxu0 0
    %536 = vmatprep.subr.bf16.mxu0 0
    %537 = vmatpush1.bf16.msra.mxu0 0
    %538 = vmatprep.subr.bf16.mxu0 0
    %539 = vmatpush1.bf16.msra.mxu0 0
    %540 = vmatprep.subr.bf16.mxu0 0
    %541 = vmatpush1.bf16.msra.mxu0 0
    %542 = vmatprep.subr.bf16.mxu0 0
    %543 = vmatpush1.bf16.msra.mxu0 0
    %544 = vmatprep.subr.bf16.mxu0 0
    %545 = vmatpush1.bf16.msra.mxu0 0
    %546 = vmatprep.subr.bf16.mxu0 0
    %547 = vmatpush1.bf16.msra.mxu0 0
    %548 = vmatprep.subr.bf16.mxu0 0
    %549 = vmatpush1.bf16.msra.mxu0 0
    %550 = vmatprep.subr.bf16.mxu0 0
    %551 = vmatpush1.bf16.msra.mxu0 0
    %552 = vmatprep.subr.bf16.mxu0 0
    %553 = vmatpush1.bf16.msra.mxu0 0
    %554 = vmatprep.subr.bf16.mxu0 0
    %555 = vmatpush1.bf16.msra.mxu0 0
    %556 = vmatprep.mubr.bf16.mxu0 0
    %557 = vmatmul.mubr.bf16.gmra.mrb[0].mxu0 %v466
    %v558 = vpop.f32.mrb[0].mxu0
    %v559 = vadd.f32 0.0, %v558
    %v560 = vpop.f32.mrb[0].mxu0
    %v561 = vadd.f32 0.0, %v560
    %v562 = vpop.f32.mrb[0].mxu0
    %v563 = vadd.f32 0.0, %v562
    %v564 = vpop.f32.mrb[0].mxu0
    %v565 = vadd.f32 0.0, %v564
    %566 = vmatprep.mubr.bf16.mxu0 0
    %567 = vmatmul.mubr.bf16.gmra.mrb[0].mxu0 %v469
    %v568 = vpop.f32.mrb[0].mxu0
    %v569 = vadd.f32 0.0, %v568
    %v570 = vpop.f32.mrb[0].mxu0
    %v571 = vadd.f32 0.0, %v570
    %v572 = vpop.f32.mrb[0].mxu0
    %v573 = vadd.f32 0.0, %v572
    %v574 = vpop.f32.mrb[0].mxu0
    %v575 = vadd.f32 0.0, %v574
    %576 = vdwg.mxu0
    %577 = vmatprep.subr.bf16.mxu0 %v397
    %578 = vmatpush1.bf16.msra.mxu0 %v396
    %579 = vmatprep.subr.bf16.mxu0 %v406
    %580 = vmatpush1.bf16.msra.mxu0 %v405
    %581 = vmatprep.subr.bf16.mxu0 %v415
    %582 = vmatpush1.bf16.msra.mxu0 %v414
    %583 = vmatprep.subr.bf16.mxu0 %v424
    %584 = vmatpush1.bf16.msra.mxu0 %v423
    %585 = vmatprep.subr.bf16.mxu0 0
    %586 = vmatpush1.bf16.msra.mxu0 0
    %587 = vmatprep.subr.bf16.mxu0 0
    %588 = vmatpush1.bf16.msra.mxu0 0
    %589 = vmatprep.subr.bf16.mxu0 0
    %590 = vmatpush1.bf16.msra.mxu0 0
    %591 = vmatprep.subr.bf16.mxu0 0
    %592 = vmatpush1.bf16.msra.mxu0 0
    %593 = vmatprep.subr.bf16.mxu0 0
    %594 = vmatpush1.bf16.msra.mxu0 0
    %595 = vmatprep.subr.bf16.mxu0 0
    %596 = vmatpush1.bf16.msra.mxu0 0
    %597 = vmatprep.subr.bf16.mxu0 0
    %598 = vmatpush1.bf16.msra.mxu0 0
    %599 = vmatprep.subr.bf16.mxu0 0
    %600 = vmatpush1.bf16.msra.mxu0 0
    %601 = vmatprep.subr.bf16.mxu0 0
    %602 = vmatpush1.bf16.msra.mxu0 0
    %603 = vmatprep.subr.bf16.mxu0 0
    %604 = vmatpush1.bf16.msra.mxu0 0
    %605 = vmatprep.subr.bf16.mxu0 0
    %606 = vmatpush1.bf16.msra.mxu0 0
    %607 = vmatprep.subr.bf16.mxu0 0
    %608 = vmatpush1.bf16.msra.mxu0 0
    %609 = vmatprep.mubr.bf16.mxu0 0
    %610 = vmatmul.mubr.bf16.gmra.mrb[0].mxu0 %v466
    %v611 = vpop.f32.mrb[0].mxu0
    %v612 = vadd.f32 0.0, %v611
    %v613 = vpop.f32.mrb[0].mxu0
    %v614 = vadd.f32 0.0, %v613
    %v615 = vpop.f32.mrb[0].mxu0
    %v616 = vadd.f32 0.0, %v615
    %v617 = vpop.f32.mrb[0].mxu0
    %v618 = vadd.f32 0.0, %v617
    %619 = vmatprep.mubr.bf16.mxu0 0
    %620 = vmatmul.mubr.bf16.gmra.mrb[0].mxu0 %v469
    %v621 = vpop.f32.mrb[0].mxu0
    %v622 = vadd.f32 0.0, %v621
    %v623 = vpop.f32.mrb[0].mxu0
    %v624 = vadd.f32 0.0, %v623
    %v625 = vpop.f32.mrb[0].mxu0
    %v626 = vadd.f32 0.0, %v625
    %v627 = vpop.f32.mrb[0].mxu0
    %v628 = vadd.f32 0.0, %v627
    %629 = vdwg.mxu0
    %630 = vmatprep.subr.bf16.mxu0 %v399
    %631 = vmatpush1.bf16.msra.mxu0 %v398
    %632 = vmatprep.subr.bf16.mxu0 %v408
    %633 = vmatpush1.bf16.msra.mxu0 %v407
    %634 = vmatprep.subr.bf16.mxu0 %v417
    %635 = vmatpush1.bf16.msra.mxu0 %v416
    %636 = vmatprep.subr.bf16.mxu0 %v426
    %637 = vmatpush1.bf16.msra.mxu0 %v425
    %638 = vmatprep.subr.bf16.mxu0 0
    %639 = vmatpush1.bf16.msra.mxu0 0
    %640 = vmatprep.subr.bf16.mxu0 0
    %641 = vmatpush1.bf16.msra.mxu0 0
    %642 = vmatprep.subr.bf16.mxu0 0
    %643 = vmatpush1.bf16.msra.mxu0 0
    %644 = vmatprep.subr.bf16.mxu0 0
    %645 = vmatpush1.bf16.msra.mxu0 0
    %646 = vmatprep.subr.bf16.mxu0 0
    %647 = vmatpush1.bf16.msra.mxu0 0
    %648 = vmatprep.subr.bf16.mxu0 0
    %649 = vmatpush1.bf16.msra.mxu0 0
    %650 = vmatprep.subr.bf16.mxu0 0
    %651 = vmatpush1.bf16.msra.mxu0 0
    %652 = vmatprep.subr.bf16.mxu0 0
    %653 = vmatpush1.bf16.msra.mxu0 0
    %654 = vmatprep.subr.bf16.mxu0 0
    %655 = vmatpush1.bf16.msra.mxu0 0
    %656 = vmatprep.subr.bf16.mxu0 0
    %657 = vmatpush1.bf16.msra.mxu0 0
    %658 = vmatprep.subr.bf16.mxu0 0
    %659 = vmatpush1.bf16.msra.mxu0 0
    %660 = vmatprep.subr.bf16.mxu0 0
    %661 = vmatpush1.bf16.msra.mxu0 0
    %662 = vmatprep.mubr.bf16.mxu0 0
    %663 = vmatmul.mubr.bf16.gmra.mrb[0].mxu0 %v466
    %v664 = vpop.f32.mrb[0].mxu0
    %v665 = vadd.f32 0.0, %v664
    %v666 = vpop.f32.mrb[0].mxu0
    %v667 = vadd.f32 0.0, %v666
    %v668 = vpop.f32.mrb[0].mxu0
    %v669 = vadd.f32 0.0, %v668
    %v670 = vpop.f32.mrb[0].mxu0
    %v671 = vadd.f32 0.0, %v670
    %672 = vmatprep.mubr.bf16.mxu0 0
    %673 = vmatmul.mubr.bf16.gmra.mrb[0].mxu0 %v469
    %v674 = vpop.f32.mrb[0].mxu0
    %v675 = vadd.f32 0.0, %v674
    %v676 = vpop.f32.mrb[0].mxu0
    %v677 = vadd.f32 0.0, %v676
    %v678 = vpop.f32.mrb[0].mxu0
    %v679 = vadd.f32 0.0, %v678
    %v680 = vpop.f32.mrb[0].mxu0
    %v681 = vadd.f32 0.0, %v680
    %682 = vdwg.mxu0
    %683 = vmatprep.subr.bf16.mxu0 0
    %684 = vmatpush1.bf16.msra.mxu0 %v400
    %685 = vmatprep.subr.bf16.mxu0 0
    %686 = vmatpush1.bf16.msra.mxu0 %v409
    %687 = vmatprep.subr.bf16.mxu0 0
    %688 = vmatpush1.bf16.msra.mxu0 %v418
    %689 = vmatprep.subr.bf16.mxu0 0
    %690 = vmatpush1.bf16.msra.mxu0 %v427
    %691 = vmatprep.subr.bf16.mxu0 0
    %692 = vmatpush1.bf16.msra.mxu0 0
    %693 = vmatprep.subr.bf16.mxu0 0
    %694 = vmatpush1.bf16.msra.mxu0 0
    %695 = vmatprep.subr.bf16.mxu0 0
    %696 = vmatpush1.bf16.msra.mxu0 0
    %697 = vmatprep.subr.bf16.mxu0 0
    %698 = vmatpush1.bf16.msra.mxu0 0
    %699 = vmatprep.subr.bf16.mxu0 0
    %700 = vmatpush1.bf16.msra.mxu0 0
    %701 = vmatprep.subr.bf16.mxu0 0
    %702 = vmatpush1.bf16.msra.mxu0 0
    %703 = vmatprep.subr.bf16.mxu0 0
    %704 = vmatpush1.bf16.msra.mxu0 0
    %705 = vmatprep.subr.bf16.mxu0 0
    %706 = vmatpush1.bf16.msra.mxu0 0
    %707 = vmatprep.subr.bf16.mxu0 0
    %708 = vmatpush1.bf16.msra.mxu0 0
    %709 = vmatprep.subr.bf16.mxu0 0
    %710 = vmatpush1.bf16.msra.mxu0 0
    %711 = vmatprep.subr.bf16.mxu0 0
    %712 = vmatpush1.bf16.msra.mxu0 0
    %713 = vmatprep.subr.bf16.mxu0 0
    %714 = vmatpush1.bf16.msra.mxu0 0
    %715 = vmatprep.mubr.bf16.mxu0 0
    %716 = vmatmul.mubr.bf16.gmra.mrb[0].mxu0 %v466
    %v717 = vpop.f32.mrb[0].mxu0
    %v718 = vadd.f32 0.0, %v717
    %v719 = vpop.f32.mrb[0].mxu0
    %v720 = vpop.f32.mrb[0].mxu0
    %v721 = vadd.f32 0.0, %v720
    %v722 = vpop.f32.mrb[0].mxu0
    %723 = vmatprep.mubr.bf16.mxu0 0
    %724 = vmatmul.mubr.bf16.gmra.mrb[0].mxu0 %v469
    %v725 = vpop.f32.mrb[0].mxu0
    %v726 = vadd.f32 0.0, %v725
    %v727 = vpop.f32.mrb[0].mxu0
    %v728 = vpop.f32.mrb[0].mxu0
    %v729 = vadd.f32 0.0, %v728
    %v730 = vpop.f32.mrb[0].mxu0
    %731 = vdwg.mxu0
    %v732 = vld [vmem:[%s6] sm:$0x1]
    %v734 = vlaneseq
    %v735 = vshrl.u32 %v734, 7
    %v736 = vsub.s32 0, %v735
    %v737 = vrot.slane %v732, %v736
    %v739 = vadd.f32 %v718, %v737
    %v740 = vadd.f32 %v721, %v737
    %v741 = vadd.f32 %v726, %v737
    %v742 = vadd.f32 %v729, %v737
    %vm743 = vcmp.gt.f32.partialorder %v739, 20.0
    %vm744 = vcmp.gt.f32.partialorder %v740, 20.0
    %vm745 = vcmp.gt.f32.partialorder %v741, 20.0
    %vm746 = vcmp.gt.f32.partialorder %v742, 20.0
    %v747 = vmin.f32 %v739, 20.0
    %v748 = vmin.f32 %v740, 20.0
    %v749 = vmin.f32 %v741, 20.0
    %v750 = vmin.f32 %v742, 20.0
    %v751 = vmul.f32 %v747, 1.442695
    %v752 = vpow.pop %v751
    %v753 = vmul.f32 %v748, 1.442695
    %v754 = vpow.pop %v753
    %v755 = vmul.f32 %v749, 1.442695
    %v756 = vpow.pop %v755
    %v757 = vmul.f32 %v750, 1.442695
    %v758 = vpow.pop %v757
    %v759 = vadd.f32 %v752, 1.0
    %v760 = vlog2.pop %v759
    %v761 = vmul.f32 %v760, 0.6931472
    %v762 = vmul.f32 -0.5, %v752
    %v763 = vadd.f32 %v762, 1.0
    %v764 = vmul.f32 %v763, %v752
    %v765 = vand.u32 2147483647, %v752
    %vm766 = vcmp.lt.f32.partialorder %v765, 0.0004427343
    %v767 = vsel %vm766, %v764, %v761
    %v768 = vadd.f32 %v754, 1.0
    %v769 = vlog2.pop %v768
    %v770 = vmul.f32 %v769, 0.6931472
    %v771 = vmul.f32 -0.5, %v754
    %v772 = vadd.f32 %v771, 1.0
    %v773 = vmul.f32 %v772, %v754
    %v774 = vand.u32 2147483647, %v754
    %vm775 = vcmp.lt.f32.partialorder %v774, 0.0004427343
    %v776 = vsel %vm775, %v773, %v770
    %v777 = vadd.f32 %v756, 1.0
    %v778 = vlog2.pop %v777
    %v779 = vmul.f32 %v778, 0.6931472
    %v780 = vmul.f32 -0.5, %v756
    %v781 = vadd.f32 %v780, 1.0
    %v782 = vmul.f32 %v781, %v756
    %v783 = vand.u32 2147483647, %v756
    %vm784 = vcmp.lt.f32.partialorder %v783, 0.0004427343
    %v785 = vsel %vm784, %v782, %v779
    %v786 = vadd.f32 %v758, 1.0
    %v787 = vlog2.pop %v786
    %v788 = vmul.f32 %v787, 0.6931472
    %v789 = vmul.f32 -0.5, %v758
    %v790 = vadd.f32 %v789, 1.0
    %v791 = vmul.f32 %v790, %v758
    %v792 = vand.u32 2147483647, %v758
    %vm793 = vcmp.lt.f32.partialorder %v792, 0.0004427343
    %v794 = vsel %vm793, %v791, %v788
    %v795 = vsel %vm743, %v739, %v767
    %v796 = vsel %vm744, %v740, %v776
    %v797 = vsel %vm745, %v741, %v785
    %v798 = vsel %vm746, %v742, %v794
    %803 = vrot.lane.b32.xlu0 %v795, 64
    %v804 = vpop.permute.xlu0 %803
    %805 = vrot.lane.b32.xlu0 %v796, 64
    %v806 = vpop.permute.xlu0 %805
    %807 = vrot.lane.b32.xlu0 %v797, 64
    %v808 = vpop.permute.xlu0 %807
    %809 = vrot.lane.b32.xlu0 %v798, 64
    %v810 = vpop.permute.xlu0 %809
    %v815 = vsel %vm464, %v795, %v804
    %v816 = vsel %vm464, %v796, %v806
    %v817 = vsel %vm464, %v797, %v808
    %v818 = vsel %vm464, %v798, %v810
    %v819 = vmul.f32 %v795, %v234
    %v820 = vmul.f32 %v796, %v235
    %v821 = vmul.f32 %v797, %v236
    %v822 = vmul.f32 %v798, %v237
    %827 = vrot.lane.b32.xlu0 %v819, 64
    %v828 = vpop.permute.xlu0 %827
    %829 = vrot.lane.b32.xlu0 %v820, 64
    %v830 = vpop.permute.xlu0 %829
    %831 = vrot.lane.b32.xlu0 %v821, 64
    %v832 = vpop.permute.xlu0 %831
    %833 = vrot.lane.b32.xlu0 %v822, 64
    %v834 = vpop.permute.xlu0 %833
    %v839 = vsel %vm464, %v819, %v828
    %v840 = vsel %vm464, %v820, %v830
    %v841 = vsel %vm464, %v821, %v832
    %v842 = vsel %vm464, %v822, %v834
    %v843 = vld [vmem:[%s7] sm:$0xf]
    %v845 = vlaneseq
    %v846 = vshrl.u32 %v845, 7
    %v847 = vsub.s32 0, %v846
    %v848 = vrot.slane %v843, %v847
    %v849 = vlaneseq
    %v850 = vshrl.u32 %v849, 7
    %v851 = vsub.s32 1, %v850
    %v852 = vrot.slane %v843, %v851
    %v853 = vlaneseq
    %v854 = vshrl.u32 %v853, 7
    %v855 = vsub.s32 2, %v854
    %v856 = vrot.slane %v843, %v855
    %v857 = vlaneseq
    %v858 = vshrl.u32 %v857, 7
    %v859 = vsub.s32 3, %v858
    %v860 = vrot.slane %v843, %v859
    %v865 = vmul.f32 %v815, %v848
    %v866 = vmul.f32 %v815, %v852
    %v867 = vmul.f32 %v815, %v856
    %v868 = vmul.f32 %v815, %v860
    %v869 = vmul.f32 %v816, %v848
    %v870 = vmul.f32 %v816, %v852
    %v871 = vmul.f32 %v816, %v856
    %v872 = vmul.f32 %v816, %v860
    %v873 = vmul.f32 %v817, %v848
    %v874 = vmul.f32 %v817, %v852
    %v875 = vmul.f32 %v817, %v856
    %v876 = vmul.f32 %v817, %v860
    %v877 = vmul.f32 %v818, %v848
    %v878 = vmul.f32 %v818, %v852
    %v879 = vmul.f32 %v818, %v856
    %v880 = vmul.f32 %v818, %v860
    %v881 = vmul.f32 %v865, 1.442695
    %v882 = vpow.pop %v881
    %v883 = vmul.f32 %v866, 1.442695
    %v884 = vpow.pop %v883
    %v885 = vmul.f32 %v867, 1.442695
    %v886 = vpow.pop %v885
    %v887 = vmul.f32 %v868, 1.442695
    %v888 = vpow.pop %v887
    %v889 = vmul.f32 %v869, 1.442695
    %v890 = vpow.pop %v889
    %v891 = vmul.f32 %v870, 1.442695
    %v892 = vpow.pop %v891
    %v893 = vmul.f32 %v871, 1.442695
    %v894 = vpow.pop %v893
    %v895 = vmul.f32 %v872, 1.442695
    %v896 = vpow.pop %v895
    %v897 = vmul.f32 %v873, 1.442695
    %v898 = vpow.pop %v897
    %v899 = vmul.f32 %v874, 1.442695
    %v900 = vpow.pop %v899
    %v901 = vmul.f32 %v875, 1.442695
    %v902 = vpow.pop %v901
    %v903 = vmul.f32 %v876, 1.442695
    %v904 = vpow.pop %v903
    %v905 = vmul.f32 %v877, 1.442695
    %v906 = vpow.pop %v905
    %v907 = vmul.f32 %v878, 1.442695
    %v908 = vpow.pop %v907
    %v909 = vmul.f32 %v879, 1.442695
    %v910 = vpow.pop %v909
    %v911 = vmul.f32 %v880, 1.442695
    %v912 = vpow.pop %v911
    %v913 = vmul.f32 %v839, %v506
    %v914 = vmul.f32 %v839, %v508
    %v915 = vmul.f32 %v839, %v559
    %v916 = vmul.f32 %v839, %v561
    %v917 = vmul.f32 %v840, %v510
    %v918 = vmul.f32 %v840, %v512
    %v919 = vmul.f32 %v840, %v563
    %v920 = vmul.f32 %v840, %v565
    %v921 = vmul.f32 %v841, %v516
    %v922 = vmul.f32 %v841, %v518
    %v923 = vmul.f32 %v841, %v569
    %v924 = vmul.f32 %v841, %v571
    %v925 = vmul.f32 %v842, %v520
    %v926 = vmul.f32 %v842, %v522
    %v927 = vmul.f32 %v842, %v573
    %v928 = vmul.f32 %v842, %v575
    %v929 = vmul.f32 %v882, 0.0
    %v930 = vmul.f32 %v884, 0.0
    %v931 = vmul.f32 %v886, 0.0
    %v932 = vmul.f32 %v888, 0.0
    %v933 = vadd.f32 %v929, %v913
    %v934 = vadd.f32 %v930, %v914
    %v935 = vadd.f32 %v931, %v915
    %v936 = vadd.f32 %v932, %v916
    %v937 = vmul.f32 %v890, %v933
    %v938 = vmul.f32 %v892, %v934
    %v939 = vmul.f32 %v894, %v935
    %v940 = vmul.f32 %v896, %v936
    %v941 = vadd.f32 %v937, %v917
    %v942 = vadd.f32 %v938, %v918
    %v943 = vadd.f32 %v939, %v919
    %v944 = vadd.f32 %v940, %v920
    %v945 = vmul.f32 %v898, %v941
    %v946 = vmul.f32 %v900, %v942
    %v947 = vmul.f32 %v902, %v943
    %v948 = vmul.f32 %v904, %v944
    %v949 = vadd.f32 %v945, %v921
    %v950 = vadd.f32 %v946, %v922
    %v951 = vadd.f32 %v947, %v923
    %v952 = vadd.f32 %v948, %v924
    %v953 = vmul.f32 %v906, %v949
    %v954 = vmul.f32 %v908, %v950
    %v955 = vmul.f32 %v910, %v951
    %v956 = vmul.f32 %v912, %v952
    %v957 = vadd.f32 %v953, %v925
    %v958 = vadd.f32 %v954, %v926
    %v959 = vadd.f32 %v955, %v927
    %v960 = vadd.f32 %v956, %v928
    %v961 = vmul.f32 %v933, %v612
    %v962 = vmul.f32 %v934, %v614
    %v963 = vmul.f32 %v935, %v665
    %v964 = vmul.f32 %v936, %v667
    %v965 = vmul.f32 %v941, %v616
    %v966 = vmul.f32 %v942, %v618
    %v967 = vmul.f32 %v943, %v669
    %v968 = vmul.f32 %v944, %v671
    %v969 = vmul.f32 %v949, %v622
    %v970 = vmul.f32 %v950, %v624
    %v971 = vmul.f32 %v951, %v675
    %v972 = vmul.f32 %v952, %v677
    %v973 = vmul.f32 %v957, %v626
    %v974 = vmul.f32 %v958, %v628
    %v975 = vmul.f32 %v959, %v679
    %v976 = vmul.f32 %v960, %v681
    %981 = vrot.lane.b32.xlu0 %v961, 64
    %v982 = vpop.permute.xlu0 %981
    %983 = vrot.lane.b32.xlu0 %v965, 64
    %v984 = vpop.permute.xlu0 %983
    %985 = vrot.lane.b32.xlu0 %v969, 64
    %v986 = vpop.permute.xlu0 %985
    %987 = vrot.lane.b32.xlu0 %v973, 64
    %v988 = vpop.permute.xlu0 %987
    %v993 = vadd.f32 %v961, %v982
    %v994 = vadd.f32 %v965, %v984
    %v995 = vadd.f32 %v969, %v986
    %v996 = vadd.f32 %v973, %v988
    %v997 = vadd.f32 %v993, %v962
    %v998 = vadd.f32 %v994, %v966
    %v999 = vadd.f32 %v995, %v970
    %v1000 = vadd.f32 %v996, %v974
    %1005 = vrot.lane.b32.xlu0 %v962, 64
    %v1006 = vpop.permute.xlu0 %1005
    %1007 = vrot.lane.b32.xlu0 %v966, 64
    %v1008 = vpop.permute.xlu0 %1007
    %1009 = vrot.lane.b32.xlu0 %v970, 64
    %v1010 = vpop.permute.xlu0 %1009
    %1011 = vrot.lane.b32.xlu0 %v974, 64
    %v1012 = vpop.permute.xlu0 %1011
    %v1017 = vadd.f32 %v997, %v1006
    %v1018 = vadd.f32 %v998, %v1008
    %v1019 = vadd.f32 %v999, %v1010
    %v1020 = vadd.f32 %v1000, %v1012
    %v1021 = vadd.f32 %v1017, %v963
    %v1022 = vadd.f32 %v1018, %v967
    %v1023 = vadd.f32 %v1019, %v971
    %v1024 = vadd.f32 %v1020, %v975
    %1029 = vrot.lane.b32.xlu0 %v963, 64
    %v1030 = vpop.permute.xlu0 %1029
    %1031 = vrot.lane.b32.xlu0 %v967, 64
    %v1032 = vpop.permute.xlu0 %1031
    %1033 = vrot.lane.b32.xlu0 %v971, 64
    %v1034 = vpop.permute.xlu0 %1033
    %1035 = vrot.lane.b32.xlu0 %v975, 64
    %v1036 = vpop.permute.xlu0 %1035
    %v1041 = vadd.f32 %v1021, %v1030
    %v1042 = vadd.f32 %v1022, %v1032
    %v1043 = vadd.f32 %v1023, %v1034
    %v1044 = vadd.f32 %v1024, %v1036
    %v1045 = vadd.f32 %v1041, %v964
    %v1046 = vadd.f32 %v1042, %v968
    %v1047 = vadd.f32 %v1043, %v972
    %v1048 = vadd.f32 %v1044, %v976
    %1053 = vrot.lane.b32.xlu0 %v964, 64
    %v1054 = vpop.permute.xlu0 %1053
    %1055 = vrot.lane.b32.xlu0 %v968, 64
    %v1056 = vpop.permute.xlu0 %1055
    %1057 = vrot.lane.b32.xlu0 %v972, 64
    %v1058 = vpop.permute.xlu0 %1057
    %1059 = vrot.lane.b32.xlu0 %v976, 64
    %v1060 = vpop.permute.xlu0 %1059
    %v1065 = vadd.f32 %v1045, %v1054
    %v1066 = vadd.f32 %v1046, %v1056
    %v1067 = vadd.f32 %v1047, %v1058
    %v1068 = vadd.f32 %v1048, %v1060
    %v1069 = vld [vmem:[%s8] sm:$0x1]
    %v1071 = vlaneseq
    %v1072 = vshrl.u32 %v1071, 7
    %v1073 = vsub.s32 0, %v1072
    %v1074 = vrot.slane %v1069, %v1073
    %v1076 = vmul.f32 %v1074, %v234
    %v1077 = vmul.f32 %v1074, %v235
    %v1078 = vmul.f32 %v1074, %v236
    %v1079 = vmul.f32 %v1074, %v237
    %v1080 = vadd.f32 %v1065, %v1076
    %v1081 = vadd.f32 %v1066, %v1077
    %v1082 = vadd.f32 %v1067, %v1078
    %v1083 = vadd.f32 %v1068, %v1079
    %v1084 = vsub.f32 0.0, %v147
    %v1085 = vsub.f32 0.0, %v150
    %v1086 = vsub.f32 0.0, %v155
    %v1087 = vsub.f32 0.0, %v158
    %v1088 = vmul.f32 %v1084, 1.442695
    %v1089 = vpow.pop %v1088
    %v1090 = vmul.f32 %v1085, 1.442695
    %v1091 = vpow.pop %v1090
    %v1092 = vmul.f32 %v1086, 1.442695
    %v1093 = vpow.pop %v1092
    %v1094 = vmul.f32 %v1087, 1.442695
    %v1095 = vpow.pop %v1094
    %v1096 = vadd.f32 %v1089, 1.0
    %v1097 = vadd.f32 %v1091, 1.0
    %v1098 = vadd.f32 %v1093, 1.0
    %v1099 = vadd.f32 %v1095, 1.0
    %v1100 = vrcp.pop %v1096
    %v1101 = vrcp.pop %v1097
    %v1102 = vrcp.pop %v1098
    %v1103 = vrcp.pop %v1099
    %v1104 = vmul.f32 %v147, %v1100
    %v1105 = vmul.f32 %v150, %v1101
    %v1106 = vmul.f32 %v155, %v1102
    %v1107 = vmul.f32 %v158, %v1103
    %1112 = vrot.lane.b32.xlu0 %v1104, 64
    %v1113 = vpop.permute.xlu0 %1112
    %1114 = vrot.lane.b32.xlu0 %v1105, 64
    %v1115 = vpop.permute.xlu0 %1114
    %1116 = vrot.lane.b32.xlu0 %v1106, 64
    %v1117 = vpop.permute.xlu0 %1116
    %1118 = vrot.lane.b32.xlu0 %v1107, 64
    %v1119 = vpop.permute.xlu0 %1118
    %v1124 = vmul.f32 %v1080, %v1113
    %v1125 = vmul.f32 %v1081, %v1115
    %v1126 = vmul.f32 %v1082, %v1117
    %v1127 = vmul.f32 %v1083, %v1119
    %v1128 = vpack.c.bf16 %v1125, %v1124
    %v1129 = vpack.c.bf16 %v1127, %v1126
    %v1130 = vld [vmem:[%s9] sm:$0xf]
    %v1131 = vld [vmem:[%s9 + $0x4] sm:$0xf]
    %v1132 = vld [vmem:[%s9 + $0x8] sm:$0xf]
    %v1133 = vld [vmem:[%s9 + $0xc] sm:$0xf]
    %v1134 = vld [vmem:[%s9 + $0x10] sm:$0xf]
    %v1135 = vld [vmem:[%s9 + $0x14] sm:$0xf]
    %v1136 = vld [vmem:[%s9 + $0x18] sm:$0xf]
    %v1137 = vld [vmem:[%s9 + $0x1c] sm:$0xf]
    %v1146 = vunpack.c.l.b16 %v1130
    %v1147 = vunpack.c.l.b16 %v1131
    %v1148 = vunpack.c.l.b16 %v1132
    %v1149 = vunpack.c.l.b16 %v1133
    %v1150 = vunpack.c.l.b16 %v1134
    %v1151 = vunpack.c.l.b16 %v1135
    %v1152 = vunpack.c.l.b16 %v1136
    %v1153 = vunpack.c.l.b16 %v1137
    %v1154 = vpack.c.b16 %v1147, %v1146
    %v1155 = vpack.c.b16 %v1149, %v1148
    %v1156 = vpack.c.b16 %v1151, %v1150
    %v1157 = vpack.c.b16 %v1153, %v1152
    %v1163 = vsel %vm464, %v1128, 0
    %v1166 = vsel %vm464, %v1129, 0
    %1168 = vmatprep.subr.bf16.mxu0 0
    %1169 = vmatpush1.bf16.msra.mxu0 %v1154
    %1170 = vmatprep.subr.bf16.mxu0 0
    %1171 = vmatpush1.bf16.msra.mxu0 %v1155
    %1172 = vmatprep.subr.bf16.mxu0 0
    %1173 = vmatpush1.bf16.msra.mxu0 %v1156
    %1174 = vmatprep.subr.bf16.mxu0 0
    %1175 = vmatpush1.bf16.msra.mxu0 %v1157
    %1176 = vmatprep.subr.bf16.mxu0 0
    %1177 = vmatpush1.bf16.msra.mxu0 0
    %1178 = vmatprep.subr.bf16.mxu0 0
    %1179 = vmatpush1.bf16.msra.mxu0 0
    %1180 = vmatprep.subr.bf16.mxu0 0
    %1181 = vmatpush1.bf16.msra.mxu0 0
    %1182 = vmatprep.subr.bf16.mxu0 0
    %1183 = vmatpush1.bf16.msra.mxu0 0
    %1184 = vmatprep.subr.bf16.mxu0 0
    %1185 = vmatpush1.bf16.msra.mxu0 0
    %1186 = vmatprep.subr.bf16.mxu0 0
    %1187 = vmatpush1.bf16.msra.mxu0 0
    %1188 = vmatprep.subr.bf16.mxu0 0
    %1189 = vmatpush1.bf16.msra.mxu0 0
    %1190 = vmatprep.subr.bf16.mxu0 0
    %1191 = vmatpush1.bf16.msra.mxu0 0
    %1192 = vmatprep.subr.bf16.mxu0 0
    %1193 = vmatpush1.bf16.msra.mxu0 0
    %1194 = vmatprep.subr.bf16.mxu0 0
    %1195 = vmatpush1.bf16.msra.mxu0 0
    %1196 = vmatprep.subr.bf16.mxu0 0
    %1197 = vmatpush1.bf16.msra.mxu0 0
    %1198 = vmatprep.subr.bf16.mxu0 0
    %1199 = vmatpush1.bf16.msra.mxu0 0
    %1200 = vmatprep.mubr.bf16.mxu0 0
    %1201 = vmatmul.mubr.bf16.gmra.mrb[0].mxu0 %v1163
    %v1202 = vpop.f32.mrb[0].mxu0
    %v1203 = vadd.f32 0.0, %v1202
    %v1204 = vpop.f32.mrb[0].mxu0
    %v1205 = vpop.f32.mrb[0].mxu0
    %v1206 = vadd.f32 0.0, %v1205
    %v1207 = vpop.f32.mrb[0].mxu0
    %1208 = vmatprep.mubr.bf16.mxu0 0
    %1209 = vmatmul.mubr.bf16.gmra.mrb[0].mxu0 %v1166
    %v1210 = vpop.f32.mrb[0].mxu0
    %v1211 = vadd.f32 0.0, %v1210
    %v1212 = vpop.f32.mrb[0].mxu0
    %v1213 = vpop.f32.mrb[0].mxu0
    %v1214 = vadd.f32 0.0, %v1213
    %v1215 = vpop.f32.mrb[0].mxu0
    %1216 = vdwg.mxu0
    %v1217 = vld [vmem:[%s10] sm:$0xf]
    %v1218 = vld [vmem:[%s11] sm:$0x1]
    %v1219 = vlaneseq
    %v1220 = vshrl.u32 %v1219, 7
    %v1221 = vsub.s32 3, %v1220
    %v1222 = vrot.slane %v1217, %v1221
    %v1223 = vmul.f32 %v1222, %v1203
    %v1224 = vmul.f32 %v1222, %v1206
    %v1225 = vmul.f32 %v1222, %v1211
    %v1226 = vmul.f32 %v1222, %v1214
    %v1228 = vlaneseq
    %v1229 = vshrl.u32 %v1228, 7
    %v1230 = vsub.s32 0, %v1229
    %v1231 = vrot.slane %v1218, %v1230
    %v1233 = vadd.f32 %v1231, %v1223
    %v1234 = vadd.f32 %v1231, %v1224
    %v1235 = vadd.f32 %v1231, %v1225
    %v1236 = vadd.f32 %v1231, %v1226
    %v1237 = vlaneseq
    %v1238 = vshrl.u32 %v1237, 7
    %v1239 = vsub.s32 2, %v1238
    %v1240 = vrot.slane %v1217, %v1239
    %v1241 = vmul.f32 %v1240, 0.0
    %v1242 = vmul.f32 %v1240, %v1203
    %v1243 = vmul.f32 %v1240, %v1206
    %v1244 = vmul.f32 %v1240, %v1211
    %v1245 = vadd.f32 %v1233, %v1241
    %v1246 = vadd.f32 %v1234, %v1242
    %v1247 = vadd.f32 %v1235, %v1243
    %v1248 = vadd.f32 %v1236, %v1244
    %v1249 = vlaneseq
    %v1250 = vshrl.u32 %v1249, 7
    %v1251 = vsub.s32 1, %v1250
    %v1252 = vrot.slane %v1217, %v1251
    %v1253 = vmul.f32 %v1252, 0.0
    %v1254 = vmul.f32 %v1252, %v1203
    %v1255 = vmul.f32 %v1252, %v1206
    %v1256 = vadd.f32 %v1245, %v1253
    %v1257 = vadd.f32 %v1246, %v1253
    %v1258 = vadd.f32 %v1247, %v1254
    %v1259 = vadd.f32 %v1248, %v1255
    %v1260 = vlaneseq
    %v1261 = vshrl.u32 %v1260, 7
    %v1262 = vsub.s32 0, %v1261
    %v1263 = vrot.slane %v1217, %v1262
    %v1264 = vmul.f32 %v1263, 0.0
    %v1265 = vmul.f32 %v1263, %v1203
    %v1266 = vadd.f32 %v1256, %v1264
    %v1267 = vadd.f32 %v1257, %v1264
    %v1268 = vadd.f32 %v1258, %v1264
    %v1269 = vadd.f32 %v1259, %v1265
    %v1270 = vsub.f32 0.0, %v1266
    %v1271 = vsub.f32 0.0, %v1267
    %v1272 = vsub.f32 0.0, %v1268
    %v1273 = vsub.f32 0.0, %v1269
    %v1274 = vmul.f32 %v1270, 1.442695
    %v1275 = vpow.pop %v1274
    %v1276 = vmul.f32 %v1271, 1.442695
    %v1277 = vpow.pop %v1276
    %v1278 = vmul.f32 %v1272, 1.442695
    %v1279 = vpow.pop %v1278
    %v1280 = vmul.f32 %v1273, 1.442695
    %v1281 = vpow.pop %v1280
    %v1282 = vadd.f32 %v1275, 1.0
    %v1283 = vadd.f32 %v1277, 1.0
    %v1284 = vadd.f32 %v1279, 1.0
    %v1285 = vadd.f32 %v1281, 1.0
    %v1286 = vrcp.pop %v1282
    %v1287 = vrcp.pop %v1283
    %v1288 = vrcp.pop %v1284
    %v1289 = vrcp.pop %v1285
    %v1290 = vmul.f32 %v1266, %v1286
    %v1291 = vmul.f32 %v1267, %v1287
    %v1292 = vmul.f32 %v1268, %v1288
    %v1293 = vmul.f32 %v1269, %v1289
    %v1294 = vpack.c.bf16 %v1291, %v1290
    %v1295 = vpack.c.bf16 %v1293, %v1292
    %v1296 = vld [vmem:[#allocation2] sm:$0xff]
    %v1297 = vld [vmem:[#allocation2 + $0x8] sm:$0xff]
    %v1298 = vld [vmem:[#allocation2 + $0x10] sm:$0xff]
    %v1299 = vld [vmem:[#allocation2 + $0x18] sm:$0xff]
    %v1300 = vld [vmem:[#allocation2 + $0x20] sm:$0xf]
    %v1301 = vld [vmem:[#allocation2 + $0x24] sm:$0xff]
    %v1302 = vld [vmem:[#allocation2 + $0x2c] sm:$0xff]
    %v1303 = vld [vmem:[#allocation2 + $0x34] sm:$0xff]
    %v1304 = vld [vmem:[#allocation2 + $0x3c] sm:$0xff]
    %v1305 = vld [vmem:[#allocation2 + $0x44] sm:$0xf]
    %v1306 = vld [vmem:[#allocation2 + $0x48] sm:$0xff]
    %v1307 = vld [vmem:[#allocation2 + $0x50] sm:$0xff]
    %v1308 = vld [vmem:[#allocation2 + $0x58] sm:$0xff]
    %v1309 = vld [vmem:[#allocation2 + $0x60] sm:$0xff]
    %v1310 = vld [vmem:[#allocation2 + $0x68] sm:$0xf]
    %v1311 = vld [vmem:[#allocation2 + $0x6c] sm:$0xff]
    %v1312 = vld [vmem:[#allocation2 + $0x74] sm:$0xff]
    %v1313 = vld [vmem:[#allocation2 + $0x7c] sm:$0xff]
    %v1314 = vld [vmem:[#allocation2 + $0x84] sm:$0xff]
    %v1315 = vld [vmem:[#allocation2 + $0x8c] sm:$0xf]
    %v1316 = vld [vmem:[#allocation2 + $0x90] sm:$0xff]
    %v1317 = vld [vmem:[#allocation2 + $0x98] sm:$0xff]
    %v1318 = vld [vmem:[#allocation2 + $0xa0] sm:$0xff]
    %v1319 = vld [vmem:[#allocation2 + $0xa8] sm:$0xff]
    %v1320 = vld [vmem:[#allocation2 + $0xb0] sm:$0xf]
    %v1321 = vld [vmem:[#allocation2 + $0xb4] sm:$0xff]
    %v1322 = vld [vmem:[#allocation2 + $0xbc] sm:$0xff]
    %v1323 = vld [vmem:[#allocation2 + $0xc4] sm:$0xff]
    %v1324 = vld [vmem:[#allocation2 + $0xcc] sm:$0xff]
    %v1325 = vld [vmem:[#allocation2 + $0xd4] sm:$0xf]
    %v1326 = vld [vmem:[#allocation2 + $0xd8] sm:$0xff]
    %v1327 = vld [vmem:[#allocation2 + $0xe0] sm:$0xff]
    %v1328 = vld [vmem:[#allocation2 + $0xe8] sm:$0xff]
    %v1329 = vld [vmem:[#allocation2 + $0xf0] sm:$0xff]
    %v1330 = vld [vmem:[#allocation2 + $0xf8] sm:$0xf]
    %v1331 = vld [vmem:[#allocation2 + $0xfc] sm:$0xff]
    %v1332 = vld [vmem:[#allocation2 + $0x104] sm:$0xff]
    %v1333 = vld [vmem:[#allocation2 + $0x10c] sm:$0xff]
    %v1334 = vld [vmem:[#allocation2 + $0x114] sm:$0xff]
    %v1335 = vld [vmem:[#allocation2 + $0x11c] sm:$0xf]
    %v1376 = vunpack.c.l.b16 %v1296
    %v1377 = vunpack.c.h.b16 %v1296
    %v1378 = vunpack.c.l.b16 %v1297
    %v1379 = vunpack.c.h.b16 %v1297
    %v1380 = vunpack.c.l.b16 %v1298
    %v1381 = vunpack.c.h.b16 %v1298
    %v1382 = vunpack.c.l.b16 %v1299
    %v1383 = vunpack.c.h.b16 %v1299
    %v1384 = vunpack.c.l.b16 %v1300
    %v1385 = vunpack.c.l.b16 %v1301
    %v1386 = vunpack.c.h.b16 %v1301
    %v1387 = vunpack.c.l.b16 %v1302
    %v1388 = vunpack.c.h.b16 %v1302
    %v1389 = vunpack.c.l.b16 %v1303
    %v1390 = vunpack.c.h.b16 %v1303
    %v1391 = vunpack.c.l.b16 %v1304
    %v1392 = vunpack.c.h.b16 %v1304
    %v1393 = vunpack.c.l.b16 %v1305
    %v1394 = vunpack.c.l.b16 %v1306
    %v1395 = vunpack.c.h.b16 %v1306
    %v1396 = vunpack.c.l.b16 %v1307
    %v1397 = vunpack.c.h.b16 %v1307
    %v1398 = vunpack.c.l.b16 %v1308
    %v1399 = vunpack.c.h.b16 %v1308
    %v1400 = vunpack.c.l.b16 %v1309
    %v1401 = vunpack.c.h.b16 %v1309
    %v1402 = vunpack.c.l.b16 %v1310
    %v1403 = vunpack.c.l.b16 %v1311
    %v1404 = vunpack.c.h.b16 %v1311
    %v1405 = vunpack.c.l.b16 %v1312
    %v1406 = vunpack.c.h.b16 %v1312
    %v1407 = vunpack.c.l.b16 %v1313
    %v1408 = vunpack.c.h.b16 %v1313
    %v1409 = vunpack.c.l.b16 %v1314
    %v1410 = vunpack.c.h.b16 %v1314
    %v1411 = vunpack.c.l.b16 %v1315
    %v1412 = vunpack.c.l.b16 %v1316
    %v1413 = vunpack.c.h.b16 %v1316
    %v1414 = vunpack.c.l.b16 %v1317
    %v1415 = vunpack.c.h.b16 %v1317
    %v1416 = vunpack.c.l.b16 %v1318
    %v1417 = vunpack.c.h.b16 %v1318
    %v1418 = vunpack.c.l.b16 %v1319
    %v1419 = vunpack.c.h.b16 %v1319
    %v1420 = vunpack.c.l.b16 %v1320
    %v1421 = vunpack.c.l.b16 %v1321
    %v1422 = vunpack.c.h.b16 %v1321
    %v1423 = vunpack.c.l.b16 %v1322
    %v1424 = vunpack.c.h.b16 %v1322
    %v1425 = vunpack.c.l.b16 %v1323
    %v1426 = vunpack.c.h.b16 %v1323
    %v1427 = vunpack.c.l.b16 %v1324
    %v1428 = vunpack.c.h.b16 %v1324
    %v1429 = vunpack.c.l.b16 %v1325
    %v1430 = vunpack.c.l.b16 %v1326
    %v1431 = vunpack.c.h.b16 %v1326
    %v1432 = vunpack.c.l.b16 %v1327
    %v1433 = vunpack.c.h.b16 %v1327
    %v1434 = vunpack.c.l.b16 %v1328
    %v1435 = vunpack.c.h.b16 %v1328
    %v1436 = vunpack.c.l.b16 %v1329
    %v1437 = vunpack.c.h.b16 %v1329
    %v1438 = vunpack.c.l.b16 %v1330
    %v1439 = vunpack.c.l.b16 %v1331
    %v1440 = vunpack.c.h.b16 %v1331
    %v1441 = vunpack.c.l.b16 %v1332
    %v1442 = vunpack.c.h.b16 %v1332
    %v1443 = vunpack.c.l.b16 %v1333
    %v1444 = vunpack.c.h.b16 %v1333
    %v1445 = vunpack.c.l.b16 %v1334
    %v1446 = vunpack.c.h.b16 %v1334
    %v1447 = vunpack.c.l.b16 %v1335
    %v1448 = vpack.c.b16 %v1385, %v1376
    %v1449 = vpack.c.b16 %v1386, %v1377
    %v1450 = vpack.c.b16 %v1387, %v1378
    %v1451 = vpack.c.b16 %v1388, %v1379
    %v1452 = vpack.c.b16 %v1389, %v1380
    %v1453 = vpack.c.b16 %v1390, %v1381
    %v1454 = vpack.c.b16 %v1391, %v1382
    %v1455 = vpack.c.b16 %v1392, %v1383
    %v1456 = vpack.c.b16 %v1393, %v1384
    %v1457 = vpack.c.b16 %v1403, %v1394
    %v1458 = vpack.c.b16 %v1404, %v1395
    %v1459 = vpack.c.b16 %v1405, %v1396
    %v1460 = vpack.c.b16 %v1406, %v1397
    %v1461 = vpack.c.b16 %v1407, %v1398
    %v1462 = vpack.c.b16 %v1408, %v1399
    %v1463 = vpack.c.b16 %v1409, %v1400
    %v1464 = vpack.c.b16 %v1410, %v1401
    %v1465 = vpack.c.b16 %v1411, %v1402
    %v1466 = vpack.c.b16 %v1421, %v1412
    %v1467 = vpack.c.b16 %v1422, %v1413
    %v1468 = vpack.c.b16 %v1423, %v1414
    %v1469 = vpack.c.b16 %v1424, %v1415
    %v1470 = vpack.c.b16 %v1425, %v1416
    %v1471 = vpack.c.b16 %v1426, %v1417
    %v1472 = vpack.c.b16 %v1427, %v1418
    %v1473 = vpack.c.b16 %v1428, %v1419
    %v1474 = vpack.c.b16 %v1429, %v1420
    %v1475 = vpack.c.b16 %v1439, %v1430
    %v1476 = vpack.c.b16 %v1440, %v1431
    %v1477 = vpack.c.b16 %v1441, %v1432
    %v1478 = vpack.c.b16 %v1442, %v1433
    %v1479 = vpack.c.b16 %v1443, %v1434
    %v1480 = vpack.c.b16 %v1444, %v1435
    %v1481 = vpack.c.b16 %v1445, %v1436
    %v1482 = vpack.c.b16 %v1446, %v1437
    %v1483 = vpack.c.b16 %v1447, %v1438
    %v1521 = vsel %vm464, %v1294, 0
    %v1524 = vsel %vm464, %v1295, 0
    %1526 = vmatprep.subr.bf16.mxu0 %v1449
    %1527 = vmatpush1.bf16.msra.mxu0 %v1448
    %1528 = vmatprep.subr.bf16.mxu0 %v1458
    %1529 = vmatpush1.bf16.msra.mxu0 %v1457
    %1530 = vmatprep.subr.bf16.mxu0 %v1467
    %1531 = vmatpush1.bf16.msra.mxu0 %v1466
    %1532 = vmatprep.subr.bf16.mxu0 %v1476
    %1533 = vmatpush1.bf16.msra.mxu0 %v1475
    %1534 = vmatprep.subr.bf16.mxu0 0
    %1535 = vmatpush1.bf16.msra.mxu0 0
    %1536 = vmatprep.subr.bf16.mxu0 0
    %1537 = vmatpush1.bf16.msra.mxu0 0
    %1538 = vmatprep.subr.bf16.mxu0 0
    %1539 = vmatpush1.bf16.msra.mxu0 0
    %1540 = vmatprep.subr.bf16.mxu0 0
    %1541 = vmatpush1.bf16.msra.mxu0 0
    %1542 = vmatprep.subr.bf16.mxu0 0
    %1543 = vmatpush1.bf16.msra.mxu0 0
    %1544 = vmatprep.subr.bf16.mxu0 0
    %1545 = vmatpush1.bf16.msra.mxu0 0
    %1546 = vmatprep.subr.bf16.mxu0 0
    %1547 = vmatpush1.bf16.msra.mxu0 0
    %1548 = vmatprep.subr.bf16.mxu0 0
    %1549 = vmatpush1.bf16.msra.mxu0 0
    %1550 = vmatprep.subr.bf16.mxu0 0
    %1551 = vmatpush1.bf16.msra.mxu0 0
    %1552 = vmatprep.subr.bf16.mxu0 0
    %1553 = vmatpush1.bf16.msra.mxu0 0
    %1554 = vmatprep.subr.bf16.mxu0 0
    %1555 = vmatpush1.bf16.msra.mxu0 0
    %1556 = vmatprep.subr.bf16.mxu0 0
    %1557 = vmatpush1.bf16.msra.mxu0 0
    %1558 = vmatprep.mubr.bf16.mxu0 0
    %1559 = vmatmul.mubr.bf16.gmra.mrb[0].mxu0 %v1521
    %v1560 = vpop.f32.mrb[0].mxu0
    %v1561 = vadd.f32 0.0, %v1560
    %v1562 = vpop.f32.mrb[0].mxu0
    %v1563 = vadd.f32 0.0, %v1562
    %v1564 = vpop.f32.mrb[0].mxu0
    %v1565 = vadd.f32 0.0, %v1564
    %v1566 = vpop.f32.mrb[0].mxu0
    %v1567 = vadd.f32 0.0, %v1566
    %1568 = vmatprep.mubr.bf16.mxu0 0
    %1569 = vmatmul.mubr.bf16.gmra.mrb[0].mxu0 %v1524
    %v1570 = vpop.f32.mrb[0].mxu0
    %v1571 = vadd.f32 0.0, %v1570
    %v1572 = vpop.f32.mrb[0].mxu0
    %v1573 = vadd.f32 0.0, %v1572
    %v1574 = vpop.f32.mrb[0].mxu0
    %v1575 = vadd.f32 0.0, %v1574
    %v1576 = vpop.f32.mrb[0].mxu0
    %v1577 = vadd.f32 0.0, %v1576
    %1578 = vdwg.mxu0
    %1579 = vmatprep.subr.bf16.mxu0 %v1451
    %1580 = vmatpush1.bf16.msra.mxu0 %v1450
    %1581 = vmatprep.subr.bf16.mxu0 %v1460
    %1582 = vmatpush1.bf16.msra.mxu0 %v1459
    %1583 = vmatprep.subr.bf16.mxu0 %v1469
    %1584 = vmatpush1.bf16.msra.mxu0 %v1468
    %1585 = vmatprep.subr.bf16.mxu0 %v1478
    %1586 = vmatpush1.bf16.msra.mxu0 %v1477
    %1587 = vmatprep.subr.bf16.mxu0 0
    %1588 = vmatpush1.bf16.msra.mxu0 0
    %1589 = vmatprep.subr.bf16.mxu0 0
    %1590 = vmatpush1.bf16.msra.mxu0 0
    %1591 = vmatprep.subr.bf16.mxu0 0
    %1592 = vmatpush1.bf16.msra.mxu0 0
    %1593 = vmatprep.subr.bf16.mxu0 0
    %1594 = vmatpush1.bf16.msra.mxu0 0
    %1595 = vmatprep.subr.bf16.mxu0 0
    %1596 = vmatpush1.bf16.msra.mxu0 0
    %1597 = vmatprep.subr.bf16.mxu0 0
    %1598 = vmatpush1.bf16.msra.mxu0 0
    %1599 = vmatprep.subr.bf16.mxu0 0
    %1600 = vmatpush1.bf16.msra.mxu0 0
    %1601 = vmatprep.subr.bf16.mxu0 0
    %1602 = vmatpush1.bf16.msra.mxu0 0
    %1603 = vmatprep.subr.bf16.mxu0 0
    %1604 = vmatpush1.bf16.msra.mxu0 0
    %1605 = vmatprep.subr.bf16.mxu0 0
    %1606 = vmatpush1.bf16.msra.mxu0 0
    %1607 = vmatprep.subr.bf16.mxu0 0
    %1608 = vmatpush1.bf16.msra.mxu0 0
    %1609 = vmatprep.subr.bf16.mxu0 0
    %1610 = vmatpush1.bf16.msra.mxu0 0
    %1611 = vmatprep.mubr.bf16.mxu0 0
    %1612 = vmatmul.mubr.bf16.gmra.mrb[0].mxu0 %v1521
    %v1613 = vpop.f32.mrb[0].mxu0
    %v1614 = vadd.f32 0.0, %v1613
    %v1615 = vpop.f32.mrb[0].mxu0
    %v1616 = vadd.f32 0.0, %v1615
    %v1617 = vpop.f32.mrb[0].mxu0
    %v1618 = vadd.f32 0.0, %v1617
    %v1619 = vpop.f32.mrb[0].mxu0
    %v1620 = vadd.f32 0.0, %v1619
    %1621 = vmatprep.mubr.bf16.mxu0 0
    %1622 = vmatmul.mubr.bf16.gmra.mrb[0].mxu0 %v1524
    %v1623 = vpop.f32.mrb[0].mxu0
    %v1624 = vadd.f32 0.0, %v1623
    %v1625 = vpop.f32.mrb[0].mxu0
    %v1626 = vadd.f32 0.0, %v1625
    %v1627 = vpop.f32.mrb[0].mxu0
    %v1628 = vadd.f32 0.0, %v1627
    %v1629 = vpop.f32.mrb[0].mxu0
    %v1630 = vadd.f32 0.0, %v1629
    %1631 = vdwg.mxu0
    %1632 = vmatprep.subr.bf16.mxu0 %v1453
    %1633 = vmatpush1.bf16.msra.mxu0 %v1452
    %1634 = vmatprep.subr.bf16.mxu0 %v1462
    %1635 = vmatpush1.bf16.msra.mxu0 %v1461
    %1636 = vmatprep.subr.bf16.mxu0 %v1471
    %1637 = vmatpush1.bf16.msra.mxu0 %v1470
    %1638 = vmatprep.subr.bf16.mxu0 %v1480
    %1639 = vmatpush1.bf16.msra.mxu0 %v1479
    %1640 = vmatprep.subr.bf16.mxu0 0
    %1641 = vmatpush1.bf16.msra.mxu0 0
    %1642 = vmatprep.subr.bf16.mxu0 0
    %1643 = vmatpush1.bf16.msra.mxu0 0
    %1644 = vmatprep.subr.bf16.mxu0 0
    %1645 = vmatpush1.bf16.msra.mxu0 0
    %1646 = vmatprep.subr.bf16.mxu0 0
    %1647 = vmatpush1.bf16.msra.mxu0 0
    %1648 = vmatprep.subr.bf16.mxu0 0
    %1649 = vmatpush1.bf16.msra.mxu0 0
    %1650 = vmatprep.subr.bf16.mxu0 0
    %1651 = vmatpush1.bf16.msra.mxu0 0
    %1652 = vmatprep.subr.bf16.mxu0 0
    %1653 = vmatpush1.bf16.msra.mxu0 0
    %1654 = vmatprep.subr.bf16.mxu0 0
    %1655 = vmatpush1.bf16.msra.mxu0 0
    %1656 = vmatprep.subr.bf16.mxu0 0
    %1657 = vmatpush1.bf16.msra.mxu0 0
    %1658 = vmatprep.subr.bf16.mxu0 0
    %1659 = vmatpush1.bf16.msra.mxu0 0
    %1660 = vmatprep.subr.bf16.mxu0 0
    %1661 = vmatpush1.bf16.msra.mxu0 0
    %1662 = vmatprep.subr.bf16.mxu0 0
    %1663 = vmatpush1.bf16.msra.mxu0 0
    %1664 = vmatprep.mubr.bf16.mxu0 0
    %1665 = vmatmul.mubr.bf16.gmra.mrb[0].mxu0 %v1521
    %v1666 = vpop.f32.mrb[0].mxu0
    %v1667 = vadd.f32 0.0, %v1666
    %v1668 = vpop.f32.mrb[0].mxu0
    %v1669 = vadd.f32 0.0, %v1668
    %v1670 = vpop.f32.mrb[0].mxu0
    %v1671 = vadd.f32 0.0, %v1670
    %v1672 = vpop.f32.mrb[0].mxu0
    %v1673 = vadd.f32 0.0, %v1672
    %1674 = vmatprep.mubr.bf16.mxu0 0
    %1675 = vmatmul.mubr.bf16.gmra.mrb[0].mxu0 %v1524
    %v1676 = vpop.f32.mrb[0].mxu0
    %v1677 = vadd.f32 0.0, %v1676
    %v1678 = vpop.f32.mrb[0].mxu0
    %v1679 = vadd.f32 0.0, %v1678
    %v1680 = vpop.f32.mrb[0].mxu0
    %v1681 = vadd.f32 0.0, %v1680
    %v1682 = vpop.f32.mrb[0].mxu0
    %v1683 = vadd.f32 0.0, %v1682
    %1684 = vdwg.mxu0
    %1685 = vmatprep.subr.bf16.mxu0 %v1455
    %1686 = vmatpush1.bf16.msra.mxu0 %v1454
    %1687 = vmatprep.subr.bf16.mxu0 %v1464
    %1688 = vmatpush1.bf16.msra.mxu0 %v1463
    %1689 = vmatprep.subr.bf16.mxu0 %v1473
    %1690 = vmatpush1.bf16.msra.mxu0 %v1472
    %1691 = vmatprep.subr.bf16.mxu0 %v1482
    %1692 = vmatpush1.bf16.msra.mxu0 %v1481
    %1693 = vmatprep.subr.bf16.mxu0 0
    %1694 = vmatpush1.bf16.msra.mxu0 0
    %1695 = vmatprep.subr.bf16.mxu0 0
    %1696 = vmatpush1.bf16.msra.mxu0 0
    %1697 = vmatprep.subr.bf16.mxu0 0
    %1698 = vmatpush1.bf16.msra.mxu0 0
    %1699 = vmatprep.subr.bf16.mxu0 0
    %1700 = vmatpush1.bf16.msra.mxu0 0
    %1701 = vmatprep.subr.bf16.mxu0 0
    %1702 = vmatpush1.bf16.msra.mxu0 0
    %1703 = vmatprep.subr.bf16.mxu0 0
    %1704 = vmatpush1.bf16.msra.mxu0 0
    %1705 = vmatprep.subr.bf16.mxu0 0
    %1706 = vmatpush1.bf16.msra.mxu0 0
    %1707 = vmatprep.subr.bf16.mxu0 0
    %1708 = vmatpush1.bf16.msra.mxu0 0
    %1709 = vmatprep.subr.bf16.mxu0 0
    %1710 = vmatpush1.bf16.msra.mxu0 0
    %1711 = vmatprep.subr.bf16.mxu0 0
    %1712 = vmatpush1.bf16.msra.mxu0 0
    %1713 = vmatprep.subr.bf16.mxu0 0
    %1714 = vmatpush1.bf16.msra.mxu0 0
    %1715 = vmatprep.subr.bf16.mxu0 0
    %1716 = vmatpush1.bf16.msra.mxu0 0
    %1717 = vmatprep.mubr.bf16.mxu0 0
    %1718 = vmatmul.mubr.bf16.gmra.mrb[0].mxu0 %v1521
    %v1719 = vpop.f32.mrb[0].mxu0
    %v1720 = vadd.f32 0.0, %v1719
    %v1721 = vpop.f32.mrb[0].mxu0
    %v1722 = vadd.f32 0.0, %v1721
    %v1723 = vpop.f32.mrb[0].mxu0
    %v1724 = vadd.f32 0.0, %v1723
    %v1725 = vpop.f32.mrb[0].mxu0
    %v1726 = vadd.f32 0.0, %v1725
    %1727 = vmatprep.mubr.bf16.mxu0 0
    %1728 = vmatmul.mubr.bf16.gmra.mrb[0].mxu0 %v1524
    %v1729 = vpop.f32.mrb[0].mxu0
    %v1730 = vadd.f32 0.0, %v1729
    %v1731 = vpop.f32.mrb[0].mxu0
    %v1732 = vadd.f32 0.0, %v1731
    %v1733 = vpop.f32.mrb[0].mxu0
    %v1734 = vadd.f32 0.0, %v1733
    %v1735 = vpop.f32.mrb[0].mxu0
    %v1736 = vadd.f32 0.0, %v1735
    %1737 = vdwg.mxu0
    %1738 = vmatprep.subr.bf16.mxu0 0
    %1739 = vmatpush1.bf16.msra.mxu0 %v1456
    %1740 = vmatprep.subr.bf16.mxu0 0
    %1741 = vmatpush1.bf16.msra.mxu0 %v1465
    %1742 = vmatprep.subr.bf16.mxu0 0
    %1743 = vmatpush1.bf16.msra.mxu0 %v1474
    %1744 = vmatprep.subr.bf16.mxu0 0
    %1745 = vmatpush1.bf16.msra.mxu0 %v1483
    %1746 = vmatprep.subr.bf16.mxu0 0
    %1747 = vmatpush1.bf16.msra.mxu0 0
    %1748 = vmatprep.subr.bf16.mxu0 0
    %1749 = vmatpush1.bf16.msra.mxu0 0
    %1750 = vmatprep.subr.bf16.mxu0 0
    %1751 = vmatpush1.bf16.msra.mxu0 0
    %1752 = vmatprep.subr.bf16.mxu0 0
    %1753 = vmatpush1.bf16.msra.mxu0 0
    %1754 = vmatprep.subr.bf16.mxu0 0
    %1755 = vmatpush1.bf16.msra.mxu0 0
    %1756 = vmatprep.subr.bf16.mxu0 0
    %1757 = vmatpush1.bf16.msra.mxu0 0
    %1758 = vmatprep.subr.bf16.mxu0 0
    %1759 = vmatpush1.bf16.msra.mxu0 0
    %1760 = vmatprep.subr.bf16.mxu0 0
    %1761 = vmatpush1.bf16.msra.mxu0 0
    %1762 = vmatprep.subr.bf16.mxu0 0
    %1763 = vmatpush1.bf16.msra.mxu0 0
    %1764 = vmatprep.subr.bf16.mxu0 0
    %1765 = vmatpush1.bf16.msra.mxu0 0
    %1766 = vmatprep.subr.bf16.mxu0 0
    %1767 = vmatpush1.bf16.msra.mxu0 0
    %1768 = vmatprep.subr.bf16.mxu0 0
    %1769 = vmatpush1.bf16.msra.mxu0 0
    %1770 = vmatprep.mubr.bf16.mxu0 0
    %1771 = vmatmul.mubr.bf16.gmra.mrb[0].mxu0 %v1521
    %v1772 = vpop.f32.mrb[0].mxu0
    %v1773 = vadd.f32 0.0, %v1772
    %v1774 = vpop.f32.mrb[0].mxu0
    %v1775 = vpop.f32.mrb[0].mxu0
    %v1776 = vadd.f32 0.0, %v1775
    %v1777 = vpop.f32.mrb[0].mxu0
    %1778 = vmatprep.mubr.bf16.mxu0 0
    %1779 = vmatmul.mubr.bf16.gmra.mrb[0].mxu0 %v1524
    %v1780 = vpop.f32.mrb[0].mxu0
    %v1781 = vadd.f32 0.0, %v1780
    %v1782 = vpop.f32.mrb[0].mxu0
    %v1783 = vpop.f32.mrb[0].mxu0
    %v1784 = vadd.f32 0.0, %v1783
    %v1785 = vpop.f32.mrb[0].mxu0
    %1786 = vdwg.mxu0
    %v1787 = vld [vmem:[%s13] sm:$0x1]
    %v1789 = vlaneseq
    %v1790 = vshrl.u32 %v1789, 7
    %v1791 = vsub.s32 0, %v1790
    %v1792 = vrot.slane %v1787, %v1791
    %v1794 = vadd.f32 %v1773, %v1792
    %v1795 = vadd.f32 %v1776, %v1792
    %v1796 = vadd.f32 %v1781, %v1792
    %v1797 = vadd.f32 %v1784, %v1792
    %vm1798 = vcmp.gt.f32.partialorder %v1794, 20.0
    %vm1799 = vcmp.gt.f32.partialorder %v1795, 20.0
    %vm1800 = vcmp.gt.f32.partialorder %v1796, 20.0
    %vm1801 = vcmp.gt.f32.partialorder %v1797, 20.0
    %v1802 = vmin.f32 %v1794, 20.0
    %v1803 = vmin.f32 %v1795, 20.0
    %v1804 = vmin.f32 %v1796, 20.0
    %v1805 = vmin.f32 %v1797, 20.0
    %v1806 = vmul.f32 %v1802, 1.442695
    %v1807 = vpow.pop %v1806
    %v1808 = vmul.f32 %v1803, 1.442695
    %v1809 = vpow.pop %v1808
    %v1810 = vmul.f32 %v1804, 1.442695
    %v1811 = vpow.pop %v1810
    %v1812 = vmul.f32 %v1805, 1.442695
    %v1813 = vpow.pop %v1812
    %v1814 = vadd.f32 %v1807, 1.0
    %v1815 = vlog2.pop %v1814
    %v1816 = vmul.f32 %v1815, 0.6931472
    %v1817 = vmul.f32 -0.5, %v1807
    %v1818 = vadd.f32 %v1817, 1.0
    %v1819 = vmul.f32 %v1818, %v1807
    %v1820 = vand.u32 2147483647, %v1807
    %vm1821 = vcmp.lt.f32.partialorder %v1820, 0.0004427343
    %v1822 = vsel %vm1821, %v1819, %v1816
    %v1823 = vadd.f32 %v1809, 1.0
    %v1824 = vlog2.pop %v1823
    %v1825 = vmul.f32 %v1824, 0.6931472
    %v1826 = vmul.f32 -0.5, %v1809
    %v1827 = vadd.f32 %v1826, 1.0
    %v1828 = vmul.f32 %v1827, %v1809
    %v1829 = vand.u32 2147483647, %v1809
    %vm1830 = vcmp.lt.f32.partialorder %v1829, 0.0004427343
    %v1831 = vsel %vm1830, %v1828, %v1825
    %v1832 = vadd.f32 %v1811, 1.0
    %v1833 = vlog2.pop %v1832
    %v1834 = vmul.f32 %v1833, 0.6931472
    %v1835 = vmul.f32 -0.5, %v1811
    %v1836 = vadd.f32 %v1835, 1.0
    %v1837 = vmul.f32 %v1836, %v1811
    %v1838 = vand.u32 2147483647, %v1811
    %vm1839 = vcmp.lt.f32.partialorder %v1838, 0.0004427343
    %v1840 = vsel %vm1839, %v1837, %v1834
    %v1841 = vadd.f32 %v1813, 1.0
    %v1842 = vlog2.pop %v1841
    %v1843 = vmul.f32 %v1842, 0.6931472
    %v1844 = vmul.f32 -0.5, %v1813
    %v1845 = vadd.f32 %v1844, 1.0
    %v1846 = vmul.f32 %v1845, %v1813
    %v1847 = vand.u32 2147483647, %v1813
    %vm1848 = vcmp.lt.f32.partialorder %v1847, 0.0004427343
    %v1849 = vsel %vm1848, %v1846, %v1843
    %v1850 = vsel %vm1798, %v1794, %v1822
    %v1851 = vsel %vm1799, %v1795, %v1831
    %v1852 = vsel %vm1800, %v1796, %v1840
    %v1853 = vsel %vm1801, %v1797, %v1849
    %1858 = vrot.lane.b32.xlu0 %v1850, 64
    %v1859 = vpop.permute.xlu0 %1858
    %1860 = vrot.lane.b32.xlu0 %v1851, 64
    %v1861 = vpop.permute.xlu0 %1860
    %1862 = vrot.lane.b32.xlu0 %v1852, 64
    %v1863 = vpop.permute.xlu0 %1862
    %1864 = vrot.lane.b32.xlu0 %v1853, 64
    %v1865 = vpop.permute.xlu0 %1864
    %v1870 = vsel %vm464, %v1850, %v1859
    %v1871 = vsel %vm464, %v1851, %v1861
    %v1872 = vsel %vm464, %v1852, %v1863
    %v1873 = vsel %vm464, %v1853, %v1865
    %v1874 = vmul.f32 %v1850, %v1290
    %v1875 = vmul.f32 %v1851, %v1291
    %v1876 = vmul.f32 %v1852, %v1292
    %v1877 = vmul.f32 %v1853, %v1293
    %1882 = vrot.lane.b32.xlu0 %v1874, 64
    %v1883 = vpop.permute.xlu0 %1882
    %1884 = vrot.lane.b32.xlu0 %v1875, 64
    %v1885 = vpop.permute.xlu0 %1884
    %1886 = vrot.lane.b32.xlu0 %v1876, 64
    %v1887 = vpop.permute.xlu0 %1886
    %1888 = vrot.lane.b32.xlu0 %v1877, 64
    %v1889 = vpop.permute.xlu0 %1888
    %v1894 = vsel %vm464, %v1874, %v1883
    %v1895 = vsel %vm464, %v1875, %v1885
    %v1896 = vsel %vm464, %v1876, %v1887
    %v1897 = vsel %vm464, %v1877, %v1889
    %v1898 = vld [vmem:[%s14] sm:$0xf]
    %v1900 = vlaneseq
    %v1901 = vshrl.u32 %v1900, 7
    %v1902 = vsub.s32 0, %v1901
    %v1903 = vrot.slane %v1898, %v1902
    %v1904 = vlaneseq
    %v1905 = vshrl.u32 %v1904, 7
    %v1906 = vsub.s32 1, %v1905
    %v1907 = vrot.slane %v1898, %v1906
    %v1908 = vlaneseq
    %v1909 = vshrl.u32 %v1908, 7
    %v1910 = vsub.s32 2, %v1909
    %v1911 = vrot.slane %v1898, %v1910
    %v1912 = vlaneseq
    %v1913 = vshrl.u32 %v1912, 7
    %v1914 = vsub.s32 3, %v1913
    %v1915 = vrot.slane %v1898, %v1914
    %v1920 = vmul.f32 %v1870, %v1903
    %v1921 = vmul.f32 %v1870, %v1907
    %v1922 = vmul.f32 %v1870, %v1911
    %v1923 = vmul.f32 %v1870, %v1915
    %v1924 = vmul.f32 %v1871, %v1903
    %v1925 = vmul.f32 %v1871, %v1907
    %v1926 = vmul.f32 %v1871, %v1911
    %v1927 = vmul.f32 %v1871, %v1915
    %v1928 = vmul.f32 %v1872, %v1903
    %v1929 = vmul.f32 %v1872, %v1907
    %v1930 = vmul.f32 %v1872, %v1911
    %v1931 = vmul.f32 %v1872, %v1915
    %v1932 = vmul.f32 %v1873, %v1903
    %v1933 = vmul.f32 %v1873, %v1907
    %v1934 = vmul.f32 %v1873, %v1911
    %v1935 = vmul.f32 %v1873, %v1915
    %v1936 = vmul.f32 %v1920, 1.442695
    %v1937 = vpow.pop %v1936
    %v1938 = vmul.f32 %v1921, 1.442695
    %v1939 = vpow.pop %v1938
    %v1940 = vmul.f32 %v1922, 1.442695
    %v1941 = vpow.pop %v1940
    %v1942 = vmul.f32 %v1923, 1.442695
    %v1943 = vpow.pop %v1942
    %v1944 = vmul.f32 %v1924, 1.442695
    %v1945 = vpow.pop %v1944
    %v1946 = vmul.f32 %v1925, 1.442695
    %v1947 = vpow.pop %v1946
    %v1948 = vmul.f32 %v1926, 1.442695
    %v1949 = vpow.pop %v1948
    %v1950 = vmul.f32 %v1927, 1.442695
    %v1951 = vpow.pop %v1950
    %v1952 = vmul.f32 %v1928, 1.442695
    %v1953 = vpow.pop %v1952
    %v1954 = vmul.f32 %v1929, 1.442695
    %v1955 = vpow.pop %v1954
    %v1956 = vmul.f32 %v1930, 1.442695
    %v1957 = vpow.pop %v1956
    %v1958 = vmul.f32 %v1931, 1.442695
    %v1959 = vpow.pop %v1958
    %v1960 = vmul.f32 %v1932, 1.442695
    %v1961 = vpow.pop %v1960
    %v1962 = vmul.f32 %v1933, 1.442695
    %v1963 = vpow.pop %v1962
    %v1964 = vmul.f32 %v1934, 1.442695
    %v1965 = vpow.pop %v1964
    %v1966 = vmul.f32 %v1935, 1.442695
    %v1967 = vpow.pop %v1966
    %v1968 = vmul.f32 %v1894, %v1561
    %v1969 = vmul.f32 %v1894, %v1563
    %v1970 = vmul.f32 %v1894, %v1614
    %v1971 = vmul.f32 %v1894, %v1616
    %v1972 = vmul.f32 %v1895, %v1565
    %v1973 = vmul.f32 %v1895, %v1567
    %v1974 = vmul.f32 %v1895, %v1618
    %v1975 = vmul.f32 %v1895, %v1620
    %v1976 = vmul.f32 %v1896, %v1571
    %v1977 = vmul.f32 %v1896, %v1573
    %v1978 = vmul.f32 %v1896, %v1624
    %v1979 = vmul.f32 %v1896, %v1626
    %v1980 = vmul.f32 %v1897, %v1575
    %v1981 = vmul.f32 %v1897, %v1577
    %v1982 = vmul.f32 %v1897, %v1628
    %v1983 = vmul.f32 %v1897, %v1630
    %v1984 = vmul.f32 %v1937, 0.0
    %v1985 = vmul.f32 %v1939, 0.0
    %v1986 = vmul.f32 %v1941, 0.0
    %v1987 = vmul.f32 %v1943, 0.0
    %v1988 = vadd.f32 %v1984, %v1968
    %v1989 = vadd.f32 %v1985, %v1969
    %v1990 = vadd.f32 %v1986, %v1970
    %v1991 = vadd.f32 %v1987, %v1971
    %v1992 = vmul.f32 %v1945, %v1988
    %v1993 = vmul.f32 %v1947, %v1989
    %v1994 = vmul.f32 %v1949, %v1990
    %v1995 = vmul.f32 %v1951, %v1991
    %v1996 = vadd.f32 %v1992, %v1972
    %v1997 = vadd.f32 %v1993, %v1973
    %v1998 = vadd.f32 %v1994, %v1974
    %v1999 = vadd.f32 %v1995, %v1975
    %v2000 = vmul.f32 %v1953, %v1996
    %v2001 = vmul.f32 %v1955, %v1997
    %v2002 = vmul.f32 %v1957, %v1998
    %v2003 = vmul.f32 %v1959, %v1999
    %v2004 = vadd.f32 %v2000, %v1976
    %v2005 = vadd.f32 %v2001, %v1977
    %v2006 = vadd.f32 %v2002, %v1978
    %v2007 = vadd.f32 %v2003, %v1979
    %v2008 = vmul.f32 %v1961, %v2004
    %v2009 = vmul.f32 %v1963, %v2005
    %v2010 = vmul.f32 %v1965, %v2006
    %v2011 = vmul.f32 %v1967, %v2007
    %v2012 = vadd.f32 %v2008, %v1980
    %v2013 = vadd.f32 %v2009, %v1981
    %v2014 = vadd.f32 %v2010, %v1982
    %v2015 = vadd.f32 %v2011, %v1983
    %v2016 = vmul.f32 %v1988, %v1667
    %v2017 = vmul.f32 %v1989, %v1669
    %v2018 = vmul.f32 %v1990, %v1720
    %v2019 = vmul.f32 %v1991, %v1722
    %v2020 = vmul.f32 %v1996, %v1671
    %v2021 = vmul.f32 %v1997, %v1673
    %v2022 = vmul.f32 %v1998, %v1724
    %v2023 = vmul.f32 %v1999, %v1726
    %v2024 = vmul.f32 %v2004, %v1677
    %v2025 = vmul.f32 %v2005, %v1679
    %v2026 = vmul.f32 %v2006, %v1730
    %v2027 = vmul.f32 %v2007, %v1732
    %v2028 = vmul.f32 %v2012, %v1681
    %v2029 = vmul.f32 %v2013, %v1683
    %v2030 = vmul.f32 %v2014, %v1734
    %v2031 = vmul.f32 %v2015, %v1736
    %2036 = vrot.lane.b32.xlu0 %v2016, 64
    %v2037 = vpop.permute.xlu0 %2036
    %2038 = vrot.lane.b32.xlu0 %v2020, 64
    %v2039 = vpop.permute.xlu0 %2038
    %2040 = vrot.lane.b32.xlu0 %v2024, 64
    %v2041 = vpop.permute.xlu0 %2040
    %2042 = vrot.lane.b32.xlu0 %v2028, 64
    %v2043 = vpop.permute.xlu0 %2042
    %v2048 = vadd.f32 %v2016, %v2037
    %v2049 = vadd.f32 %v2020, %v2039
    %v2050 = vadd.f32 %v2024, %v2041
    %v2051 = vadd.f32 %v2028, %v2043
    %v2052 = vadd.f32 %v2048, %v2017
    %v2053 = vadd.f32 %v2049, %v2021
    %v2054 = vadd.f32 %v2050, %v2025
    %v2055 = vadd.f32 %v2051, %v2029
    %2060 = vrot.lane.b32.xlu0 %v2017, 64
    %v2061 = vpop.permute.xlu0 %2060
    %2062 = vrot.lane.b32.xlu0 %v2021, 64
    %v2063 = vpop.permute.xlu0 %2062
    %2064 = vrot.lane.b32.xlu0 %v2025, 64
    %v2065 = vpop.permute.xlu0 %2064
    %2066 = vrot.lane.b32.xlu0 %v2029, 64
    %v2067 = vpop.permute.xlu0 %2066
    %v2072 = vadd.f32 %v2052, %v2061
    %v2073 = vadd.f32 %v2053, %v2063
    %v2074 = vadd.f32 %v2054, %v2065
    %v2075 = vadd.f32 %v2055, %v2067
    %v2076 = vadd.f32 %v2072, %v2018
    %v2077 = vadd.f32 %v2073, %v2022
    %v2078 = vadd.f32 %v2074, %v2026
    %v2079 = vadd.f32 %v2075, %v2030
    %2084 = vrot.lane.b32.xlu0 %v2018, 64
    %v2085 = vpop.permute.xlu0 %2084
    %2086 = vrot.lane.b32.xlu0 %v2022, 64
    %v2087 = vpop.permute.xlu0 %2086
    %2088 = vrot.lane.b32.xlu0 %v2026, 64
    %v2089 = vpop.permute.xlu0 %2088
    %2090 = vrot.lane.b32.xlu0 %v2030, 64
    %v2091 = vpop.permute.xlu0 %2090
    %v2096 = vadd.f32 %v2076, %v2085
    %v2097 = vadd.f32 %v2077, %v2087
    %v2098 = vadd.f32 %v2078, %v2089
    %v2099 = vadd.f32 %v2079, %v2091
    %v2100 = vadd.f32 %v2096, %v2019
    %v2101 = vadd.f32 %v2097, %v2023
    %v2102 = vadd.f32 %v2098, %v2027
    %v2103 = vadd.f32 %v2099, %v2031
    %2108 = vrot.lane.b32.xlu0 %v2019, 64
    %v2109 = vpop.permute.xlu0 %2108
    %2110 = vrot.lane.b32.xlu0 %v2023, 64
    %v2111 = vpop.permute.xlu0 %2110
    %2112 = vrot.lane.b32.xlu0 %v2027, 64
    %v2113 = vpop.permute.xlu0 %2112
    %2114 = vrot.lane.b32.xlu0 %v2031, 64
    %v2115 = vpop.permute.xlu0 %2114
    %v2120 = vadd.f32 %v2100, %v2109
    %v2121 = vadd.f32 %v2101, %v2111
    %v2122 = vadd.f32 %v2102, %v2113
    %v2123 = vadd.f32 %v2103, %v2115
    %v2124 = vld [vmem:[%s15] sm:$0x1]
    %v2126 = vlaneseq
    %v2127 = vshrl.u32 %v2126, 7
    %v2128 = vsub.s32 0, %v2127
    %v2129 = vrot.slane %v2124, %v2128
    %v2131 = vmul.f32 %v2129, %v1290
    %v2132 = vmul.f32 %v2129, %v1291
    %v2133 = vmul.f32 %v2129, %v1292
    %v2134 = vmul.f32 %v2129, %v1293
    %v2135 = vadd.f32 %v2120, %v2131
    %v2136 = vadd.f32 %v2121, %v2132
    %v2137 = vadd.f32 %v2122, %v2133
    %v2138 = vadd.f32 %v2123, %v2134
    %v2139 = vsub.f32 0.0, %v1203
    %v2140 = vsub.f32 0.0, %v1206
    %v2141 = vsub.f32 0.0, %v1211
    %v2142 = vsub.f32 0.0, %v1214
    %v2143 = vmul.f32 %v2139, 1.442695
    %v2144 = vpow.pop %v2143
    %v2145 = vmul.f32 %v2140, 1.442695
    %v2146 = vpow.pop %v2145
    %v2147 = vmul.f32 %v2141, 1.442695
    %v2148 = vpow.pop %v2147
    %v2149 = vmul.f32 %v2142, 1.442695
    %v2150 = vpow.pop %v2149
    %v2151 = vadd.f32 %v2144, 1.0
    %v2152 = vadd.f32 %v2146, 1.0
    %v2153 = vadd.f32 %v2148, 1.0
    %v2154 = vadd.f32 %v2150, 1.0
    %v2155 = vrcp.pop %v2151
    %v2156 = vrcp.pop %v2152
    %v2157 = vrcp.pop %v2153
    %v2158 = vrcp.pop %v2154
    %v2159 = vmul.f32 %v1203, %v2155
    %v2160 = vmul.f32 %v1206, %v2156
    %v2161 = vmul.f32 %v1211, %v2157
    %v2162 = vmul.f32 %v1214, %v2158
    %2167 = vrot.lane.b32.xlu0 %v2159, 64
    %v2168 = vpop.permute.xlu0 %2167
    %2169 = vrot.lane.b32.xlu0 %v2160, 64
    %v2170 = vpop.permute.xlu0 %2169
    %2171 = vrot.lane.b32.xlu0 %v2161, 64
    %v2172 = vpop.permute.xlu0 %2171
    %2173 = vrot.lane.b32.xlu0 %v2162, 64
    %v2174 = vpop.permute.xlu0 %2173
    %v2179 = vmul.f32 %v2135, %v2168
    %v2180 = vmul.f32 %v2136, %v2170
    %v2181 = vmul.f32 %v2137, %v2172
    %v2182 = vmul.f32 %v2138, %v2174
    %2184 = vrot.lane.b32.xlu0 %v2180, 64
    %v2185 = vpop.permute.xlu0 %2184
    %2188 = vrot.lane.b32.xlu0 %v2182, 64
    %v2189 = vpop.permute.xlu0 %2188
    %v2191 = vsel %vm464, %v2179, %v2185
    %v2192 = vsel %vm464, %v2181, %v2189
    %v2193 = vpack.c.bf16 %v2191, %v2191
    %v2194 = vpack.c.bf16 %v2192, %v2192
    %v2195 = vld [vmem:[%s16] sm:$0xf]
    %v2196 = vld [vmem:[%s16 + $0x4] sm:$0xf]
    %v2197 = vld [vmem:[%s16 + $0x8] sm:$0xf]
    %v2198 = vld [vmem:[%s16 + $0xc] sm:$0xf]
    %v2199 = vld [vmem:[%s16 + $0x10] sm:$0xf]
    %v2200 = vld [vmem:[%s16 + $0x14] sm:$0xf]
    %v2201 = vld [vmem:[%s16 + $0x18] sm:$0xf]
    %v2202 = vld [vmem:[%s16 + $0x1c] sm:$0xf]
    %v2203 = vld [vmem:[%s16 + $0x20] sm:$0xf]
    %v2204 = vld [vmem:[%s16 + $0x24] sm:$0xf]
    %v2205 = vld [vmem:[%s16 + $0x28] sm:$0xf]
    %v2206 = vld [vmem:[%s16 + $0x2c] sm:$0xf]
    %v2207 = vld [vmem:[%s16 + $0x30] sm:$0xf]
    %v2208 = vld [vmem:[%s16 + $0x34] sm:$0xf]
    %v2209 = vld [vmem:[%s16 + $0x38] sm:$0xf]
    %v2210 = vld [vmem:[%s16 + $0x3c] sm:$0xf]
    %v2211 = vld [vmem:[%s16 + $0x40] sm:$0xf]
    %v2212 = vld [vmem:[%s16 + $0x44] sm:$0xf]
    %v2213 = vld [vmem:[%s16 + $0x48] sm:$0xf]
    %v2214 = vld [vmem:[%s16 + $0x4c] sm:$0xf]
    %v2215 = vld [vmem:[%s16 + $0x50] sm:$0xf]
    %v2216 = vld [vmem:[%s16 + $0x54] sm:$0xf]
    %v2217 = vld [vmem:[%s16 + $0x58] sm:$0xf]
    %v2218 = vld [vmem:[%s16 + $0x5c] sm:$0xf]
    %v2219 = vld [vmem:[%s16 + $0x60] sm:$0xf]
    %v2220 = vld [vmem:[%s16 + $0x64] sm:$0xf]
    %v2221 = vld [vmem:[%s16 + $0x68] sm:$0xf]
    %v2222 = vld [vmem:[%s16 + $0x6c] sm:$0xf]
    %v2223 = vld [vmem:[%s16 + $0x70] sm:$0xf]
    %v2224 = vld [vmem:[%s16 + $0x74] sm:$0xf]
    %v2225 = vld [vmem:[%s16 + $0x78] sm:$0xf]
    %v2226 = vld [vmem:[%s16 + $0x7c] sm:$0xf]
    %v2227 = vld [vmem:[%s17] sm:$0x1]
    %v2229 = vlaneseq
    %v2230 = vshrl.u32 %v2229, 7
    %v2231 = vsub.s32 0, %v2230
    %v2232 = vrot.slane %v2227, %v2231
    %v2266 = vunpack.c.l.b16 %v2195
    %v2267 = vunpack.c.l.b16 %v2196
    %v2268 = vunpack.c.l.b16 %v2197
    %v2269 = vunpack.c.l.b16 %v2198
    %v2270 = vunpack.c.l.b16 %v2199
    %v2271 = vunpack.c.l.b16 %v2200
    %v2272 = vunpack.c.l.b16 %v2201
    %v2273 = vunpack.c.l.b16 %v2202
    %v2274 = vunpack.c.l.b16 %v2203
    %v2275 = vunpack.c.l.b16 %v2204
    %v2276 = vunpack.c.l.b16 %v2205
    %v2277 = vunpack.c.l.b16 %v2206
    %v2278 = vunpack.c.l.b16 %v2207
    %v2279 = vunpack.c.l.b16 %v2208
    %v2280 = vunpack.c.l.b16 %v2209
    %v2281 = vunpack.c.l.b16 %v2210
    %v2282 = vunpack.c.l.b16 %v2211
    %v2283 = vunpack.c.l.b16 %v2212
    %v2284 = vunpack.c.l.b16 %v2213
    %v2285 = vunpack.c.l.b16 %v2214
    %v2286 = vunpack.c.l.b16 %v2215
    %v2287 = vunpack.c.l.b16 %v2216
    %v2288 = vunpack.c.l.b16 %v2217
    %v2289 = vunpack.c.l.b16 %v2218
    %v2290 = vunpack.c.l.b16 %v2219
    %v2291 = vunpack.c.l.b16 %v2220
    %v2292 = vunpack.c.l.b16 %v2221
    %v2293 = vunpack.c.l.b16 %v2222
    %v2294 = vunpack.c.l.b16 %v2223
    %v2295 = vunpack.c.l.b16 %v2224
    %v2296 = vunpack.c.l.b16 %v2225
    %v2297 = vunpack.c.l.b16 %v2226
    %v2298 = vpack.c.b16 %v2267, %v2266
    %v2299 = vpack.c.b16 %v2269, %v2268
    %v2300 = vpack.c.b16 %v2271, %v2270
    %v2301 = vpack.c.b16 %v2273, %v2272
    %v2302 = vpack.c.b16 %v2275, %v2274
    %v2303 = vpack.c.b16 %v2277, %v2276
    %v2304 = vpack.c.b16 %v2279, %v2278
    %v2305 = vpack.c.b16 %v2281, %v2280
    %v2306 = vpack.c.b16 %v2283, %v2282
    %v2307 = vpack.c.b16 %v2285, %v2284
    %v2308 = vpack.c.b16 %v2287, %v2286
    %v2309 = vpack.c.b16 %v2289, %v2288
    %v2310 = vpack.c.b16 %v2291, %v2290
    %v2311 = vpack.c.b16 %v2293, %v2292
    %v2312 = vpack.c.b16 %v2295, %v2294
    %v2313 = vpack.c.b16 %v2297, %v2296
    %2330 = vmatprep.subr.bf16.mxu0 0
    %2331 = vmatpush1.bf16.msra.mxu0 %v2298
    %2332 = vmatprep.subr.bf16.mxu0 0
    %2333 = vmatpush1.bf16.msra.mxu0 %v2299
    %2334 = vmatprep.subr.bf16.mxu0 0
    %2335 = vmatpush1.bf16.msra.mxu0 %v2300
    %2336 = vmatprep.subr.bf16.mxu0 0
    %2337 = vmatpush1.bf16.msra.mxu0 %v2301
    %2338 = vmatprep.subr.bf16.mxu0 0
    %2339 = vmatpush1.bf16.msra.mxu0 %v2302
    %2340 = vmatprep.subr.bf16.mxu0 0
    %2341 = vmatpush1.bf16.msra.mxu0 %v2303
    %2342 = vmatprep.subr.bf16.mxu0 0
    %2343 = vmatpush1.bf16.msra.mxu0 %v2304
    %2344 = vmatprep.subr.bf16.mxu0 0
    %2345 = vmatpush1.bf16.msra.mxu0 %v2305
    %2346 = vmatprep.subr.bf16.mxu0 0
    %2347 = vmatpush1.bf16.msra.mxu0 %v2306
    %2348 = vmatprep.subr.bf16.mxu0 0
    %2349 = vmatpush1.bf16.msra.mxu0 %v2307
    %2350 = vmatprep.subr.bf16.mxu0 0
    %2351 = vmatpush1.bf16.msra.mxu0 %v2308
    %2352 = vmatprep.subr.bf16.mxu0 0
    %2353 = vmatpush1.bf16.msra.mxu0 %v2309
    %2354 = vmatprep.subr.bf16.mxu0 0
    %2355 = vmatpush1.bf16.msra.mxu0 %v2310
    %2356 = vmatprep.subr.bf16.mxu0 0
    %2357 = vmatpush1.bf16.msra.mxu0 %v2311
    %2358 = vmatprep.subr.bf16.mxu0 0
    %2359 = vmatpush1.bf16.msra.mxu0 %v2312
    %2360 = vmatprep.subr.bf16.mxu0 0
    %2361 = vmatpush1.bf16.msra.mxu0 %v2313
    %2362 = vmatprep.mubr.bf16.mxu0 %v2194
    %2363 = vmatmul.mubr.bf16.gmra.mrb[0].mxu0 %v2193
    %v2364 = vpop.f32.mrb[0].mxu0
    %v2365 = vadd.f32 %v2232, %v2364
    %v2366 = vpop.f32.mrb[0].mxu0
    %v2367 = vpop.f32.mrb[0].mxu0
    %v2368 = vpop.f32.mrb[0].mxu0
    %2369 = vdwg.mxu0
    %vm2370 = vcmask 64512
    %2371 = vst.msk [vmem:[%s18] sm:$0xff] %vm2370, %v2365
    // Predicated region
    $region78: #{forward.1} parent=1 // pred_check
      _
    $region79: #{forward.1} parent=1 // pred_check_branch
      %2373 = sbr.rel (0) target = $region81
    $region80: #{forward.1} parent=1 // pred_region
      _
    $region81: #{forward.1} parent=1 // pred_fallthru
      _
    // Predicated region
    $region82: #{forward.1} parent=1 // pred_check
      _
    $region83: #{forward.1} parent=1 // pred_check_branch
      %2375 = sbr.rel (0) target = $region85
    $region84: #{forward.1} parent=1 // pred_region
      _
    $region85: #{forward.1} parent=1 // pred_fallthru
      _
    %2376 = vsyncpa [#allocation3], 1

</llo_original>
